<compile_context>
chip_gen: v7x
topology: tpu7x:2x2x1
jax: 0.10.0
libtpu: 0.0.40
codegen_flags: <defaults>
</compile_context>

<pallas_src>
import jax
import jax.numpy as jnp
import numpy as np
from jax.experimental import pallas as pl
from jax.experimental.pallas import tpu as pltpu


def gated_gcn_kernel(wcat_ref, bcat_ref, x_ref, y_ref):
    # wcat_ref : (F_in, 2*F_out) bf16  [fused(agg o update_proj) | lifted gate_proj]
    # bcat_ref : (1, 2*F_out)    f32   [update bias | gate bias] tiled over (C, N)
    # x_ref    : (bb, F_in)      bf16  flattened (padded) batch rows
    # y_ref    : (bb, F_out)
    f_out = y_ref.shape[-1]
    x = x_ref[...]                                              # (bb, F_in) bf16
    z = jnp.dot(x, wcat_ref[...],
                preferred_element_type=jnp.float32) + bcat_ref[...]
    g = jnp.tanh(z[:, :f_out])                                  # update path
    gate = jax.nn.sigmoid(z[:, f_out:])                         # gate path
    xf = x.astype(jnp.float32)
    # Residual reuses x directly: requires seq_out == seq_in (asserted outside).
    y_ref[...] = (xf + gate * (g - xf)).astype(y_ref.dtype)


def _round_up(v, m):
    return ((v + m - 1) // m) * m


def _pick_batch_block(B, F_in, F_out, x_bytes, y_bytes, max_bytes=24 << 20):
    """Sublane-aligned (multiple of 8), MXU-sized batch block.  B is padded
    up to a multiple of bb by the caller; bb is NOT required to divide B.
    Capped so double-buffered x/y slabs + the f32 result slab stay well
    inside scoped VMEM on all generations (incl. v7x's 64 MiB)."""
    per_row = 2 * (F_in * x_bytes + F_out * y_bytes) + 2 * F_out * 4
    cap = max(8, ((max_bytes // per_row) // 8) * 8)
    if B <= 256:
        bb = min(_round_up(B, 8), cap)
    else:
        # Large B: big blocks (up to ~2K rows) amortize per-grid-step overhead.
        bb = min(cap, 2048, _round_up(min(B, 2048), 256))
    return max(8, bb)


def gated_gcn_forward(x, nodes1, nodes2, gate_w, gate_b, upd_w, upd_b):
    """x: (B, C, N, T).  Weights follow torch.nn.Linear convention:
    gate_w: (Tout, T), upd_w: (Tout, H*T)."""
    B, C, N, T = x.shape
    H = nodes1.shape[0]
    Tout = gate_w.shape[0]
    assert Tout == T, "gated_gcn residual `(1-gate)*x` requires seq_out == seq_in"

    F_in = C * N * T
    F_out = C * N * Tout
    # Fused concatenated weight must fit single-buffered in VMEM on all gens.
    assert F_in * (2 * F_out) * 2 <= (16 << 20), (
        "fused weight too large for VMEM")
    # TODO(synk): for much larger C*N*T (or if MXU-bound on v5e), replace the
    # dense fused lift (which scales as (C*N*T)^2 and inflates FLOPs by ~N)
    # with the structured two-matmul aggregation + update path.

    f32 = jnp.float32

    # ---- batch-invariant precompute (all in f32), hoisted out of the kernel --
    logits = jnp.einsum('hcd,hed->hce', nodes1.astype(f32), nodes2.astype(f32))
    logits = logits + (-1.0e9) * jnp.eye(C, dtype=f32)[None]
    adj = jax.nn.softmax(logits, axis=-1)                          # (H, C, C)

    uw3 = upd_w.astype(f32).reshape(Tout, H, T)
    # W[c, i, t, o] = sum_h adj[h, c, i] * upd_w[o, h*T + t]
    W = jnp.einsum('hci,oht->cito', adj, uw3)                      # (C, C, T, Tout)

    eye_n = jnp.eye(N, dtype=f32)
    eye_c = jnp.eye(C, dtype=f32)
    # Rows indexed by flat (i, n, t) (= x layout), cols by flat (c, n', o).
    wfull = jnp.einsum('cito,nm->intcmo', W, eye_n).reshape(F_in, F_out)
    gfull = jnp.einsum('ot,ic,nm->intcmo', gate_w.astype(f32), eye_c,
                       eye_n).reshape(F_in, F_out)
    ub_big = jnp.tile(upd_b.astype(f32), C * N).reshape(1, F_out)
    gb_big = jnp.tile(gate_b.astype(f32), C * N).reshape(1, F_out)

    # One matmul per tile: concatenate update + gate maps along the output dim.
    wcat = jnp.concatenate([wfull, gfull], axis=1).astype(jnp.bfloat16)
    bcat = jnp.concatenate([ub_big, gb_big], axis=1)               # f32 bias

    # ---- batch blocking (padded, lane-dense, sublane-aligned) ----------------
    out_dtype = x.dtype
    x_bytes = 2                                   # bf16 x slabs
    y_bytes = jnp.dtype(out_dtype).itemsize
    bb = _pick_batch_block(B, F_in, F_out, x_bytes, y_bytes)
    # v7x dual-TensorCore: prefer >=2 grid steps, but only once each half is
    # still a full MXU tile.  Harmless on v5e/v6e.
    if _round_up(B, bb) // bb == 1 and bb >= 512 and (bb // 2) % 8 == 0:
        bb //= 2
    Bpad = _round_up(B, bb)
    nblk = Bpad // bb

    xr = x.reshape(B, F_in).astype(jnp.bfloat16)
    if Bpad != B:
        xr = jnp.pad(xr, ((0, Bpad - B), (0, 0)))

    # ---- VMEM budget (explicit, generation-safe) -----------------------------
    vmem_need = (2 * wcat.size * 2                 # weight (conservative x2)
                 + 2 * bcat.size * 4
                 + 2 * bb * F_in * x_bytes         # double-buffered x
                 + 2 * bb * F_out * y_bytes        # double-buffered y
                 + bb * 2 * F_out * 4              # f32 matmul result slab
                 + (2 << 20))                      # headroom
    vmem_limit = int(min(56 << 20, max(vmem_need, 8 << 20)))

    def const_spec(arr):
        return pl.BlockSpec(arr.shape, lambda i: (0, 0),
                            pipeline_mode=pl.Buffered(1))

    y = pl.pallas_call(
        gated_gcn_kernel,
        out_shape=jax.ShapeDtypeStruct((Bpad, F_out), out_dtype),
        grid=(nblk,),
        in_specs=[
            const_spec(wcat),
            const_spec(bcat),
            pl.BlockSpec((bb, F_in), lambda i: (i, 0)),
        ],
        out_specs=pl.BlockSpec((bb, F_out), lambda i: (i, 0)),
        compiler_params=pltpu.CompilerParams(
            dimension_semantics=("parallel",),
            vmem_limit_bytes=vmem_limit),
    )(wcat, bcat, xr)

    return y[:B].reshape(B, C, N, Tout)


def gated_gcn_ref(x, nodes1, nodes2, gate_w, gate_b, upd_w, upd_b):
    """Pure-JAX f32 reference mirroring the PyTorch forward (eval mode)."""
    B, C, N, T = x.shape
    H = nodes1.shape[0]
    adj = jnp.einsum('hcd,hed->hce', nodes1, nodes2)
    adj = adj + (-1.0e9 * jnp.eye(C, dtype=jnp.float32))[None]
    adj = jax.nn.softmax(adj, axis=-1)
    g = jnp.einsum('hoi,bins->bhons', adj, x)
    g = jnp.transpose(g, (0, 2, 3, 1, 4)).reshape(B, C, N, H * T)
    g = jnp.tanh(g @ upd_w.T + upd_b)
    gate = jax.nn.sigmoid(x @ gate_w.T + gate_b)
    return gate * g + (1.0 - gate) * x


if __name__ == "__main__":
    # Small shapes consistent with the module.
    B, C, N = 2, 4, 16
    seq_in = seq_out = 8
    hid_dim = 32
    heads = 3

    key = jax.random.PRNGKey(0)
    k1, k2, k3, k4, k5, k6, k7 = jax.random.split(key, 7)

    nodes1 = jax.random.normal(k1, (heads, C, hid_dim), jnp.float32)
    nodes2 = jax.random.normal(k2, (heads, C, hid_dim), jnp.float32)

    bg = 1.0 / np.sqrt(seq_in)
    gate_w = jax.random.uniform(k3, (seq_out, seq_in), jnp.float32, -bg, bg)
    gate_b = jax.random.uniform(k4, (seq_out,), jnp.float32, -bg, bg)

    bu = 1.0 / np.sqrt(heads * seq_in)
    upd_w = jax.random.uniform(k5, (seq_out, heads * seq_in), jnp.float32, -bu, bu)
    upd_b = jax.random.uniform(k6, (seq_out,), jnp.float32, -bu, bu)

    x = jax.random.normal(k7, (B, C, N, seq_in), jnp.float32)

    y = gated_gcn_forward(x, nodes1, nodes2, gate_w, gate_b, upd_w, upd_b)
    y = jax.block_until_ready(y)

    y_ref = gated_gcn_ref(x, nodes1, nodes2, gate_w, gate_b, upd_w, upd_b)
    # bf16 operands (MXU path) vs f32 reference -> relaxed tolerance.
    np.testing.assert_allclose(np.asarray(y), np.asarray(y_ref),
                               rtol=3e-2, atol=3e-2)
    print("KERNEL_OK")
</pallas_src>

<mosaic_0001>
module attributes {stable_mosaic.version = 11 : i64} {
  func.func @gated_gcn_kernel(%arg0: i32, %arg1: memref<512x1024xbf16, #tpu.memory_space<vmem>>, %arg2: memref<1x1024xf32, #tpu.memory_space<vmem>>, %arg3: memref<8x512xbf16, #tpu.memory_space<vmem>>, %arg4: memref<8x512xf32, #tpu.memory_space<vmem>>) attributes {dimension_semantics = [#tpu.dimension_semantics<parallel>], iteration_bounds = array<i64: 1>, scalar_prefetch = 0 : i64, scratch_operands = 0 : i64, tpu.core_type = #tpu.core_type<tc>, window_params = [{pipeline_mode = #tpu.pipeline_mode<synchronous>, transform_indices = @transform_0, window_bounds = array<i64: 512, 1024>}, {pipeline_mode = #tpu.pipeline_mode<synchronous>, transform_indices = @transform_1, window_bounds = array<i64: 1, 1024>}, {transform_indices = @transform_2, window_bounds = array<i64: 8, 512>}, {transform_indices = @transform_3, window_bounds = array<i64: 8, 512>}]} {
    %c0 = arith.constant 0 : index
    %c0_0 = arith.constant 0 : index
    %0 = vector.load %arg3[%c0, %c0_0] : memref<8x512xbf16, #tpu.memory_space<vmem>>, vector<8x512xbf16>
    %c0_1 = arith.constant 0 : index
    %c0_2 = arith.constant 0 : index
    %1 = vector.load %arg1[%c0_1, %c0_2] : memref<512x1024xbf16, #tpu.memory_space<vmem>>, vector<512x1024xbf16>
    %cst = arith.constant dense<0.000000e+00> : vector<8x1024xf32>
    %2 = tpu.matmul %0, %1, %cst {dimension_numbers = #tpu.dot_dimension_numbers<[1], [0], [0], [1], [0, 0, 1, 1], [], []>} : vector<8x512xbf16>, vector<512x1024xbf16>, vector<8x1024xf32> -> vector<8x1024xf32>
    %c0_3 = arith.constant 0 : index
    %c0_4 = arith.constant 0 : index
    %3 = vector.load %arg2[%c0_3, %c0_4] : memref<1x1024xf32, #tpu.memory_space<vmem>>, vector<1x1024xf32>
    %4 = vector.broadcast %3 : vector<1x1024xf32> to vector<8x1024xf32>
    %5 = arith.addf %2, %4 : vector<8x1024xf32>
    %6 = vector.extract_strided_slice %5 {offsets = [0, 0], sizes = [8, 512], strides = [1, 1]} : vector<8x1024xf32> to vector<8x512xf32>
    %7 = math.tanh %6 : vector<8x512xf32>
    %8 = vector.extract_strided_slice %5 {offsets = [0, 512], sizes = [8, 512], strides = [1, 1]} : vector<8x1024xf32> to vector<8x512xf32>
    %9 = arith.negf %8 : vector<8x512xf32>
    %10 = math.exp %9 : vector<8x512xf32>
    %cst_5 = arith.constant 1.000000e+00 : f32
    %11 = vector.broadcast %cst_5 : f32 to vector<8x512xf32>
    %12 = arith.addf %11, %10 : vector<8x512xf32>
    %13 = arith.divf %11, %12 : vector<8x512xf32>
    %14 = arith.extf %0 : vector<8x512xbf16> to vector<8x512xf32>
    %15 = arith.subf %7, %14 : vector<8x512xf32>
    %16 = arith.mulf %13, %15 : vector<8x512xf32>
    %17 = arith.addf %14, %16 : vector<8x512xf32>
    %c0_6 = arith.constant 0 : index
    %c0_7 = arith.constant 0 : index
    %18 = vector.load %arg4[%c0_6, %c0_7] : memref<8x512xf32, #tpu.memory_space<vmem>>, vector<8x512xf32>
    tpu.vector_store %arg4[%c0_6, %c0_7], %17 {strides = array<i32>} : memref<8x512xf32, #tpu.memory_space<vmem>>, vector<8x512xf32>,
    return
  }
  func.func @transform_0(%arg0: i32) -> (i32, i32) {
    %c0_i32 = arith.constant 0 : i32
    %c0_i32_0 = arith.constant 0 : i32
    %c0_i32_1 = arith.constant 0 : i32
    return %c0_i32, %c0_i32_0 : i32, i32
  }
  func.func @transform_1(%arg0: i32) -> (i32, i32) {
    %c0_i32 = arith.constant 0 : i32
    %c0_i32_0 = arith.constant 0 : i32
    %c0_i32_1 = arith.constant 0 : i32
    return %c0_i32, %c0_i32_0 : i32, i32
  }
  func.func @transform_2(%arg0: i32) -> (i32, i32) {
    %c0_i32 = arith.constant 0 : i32
    %c0_i32_0 = arith.constant 0 : i32
    return %arg0, %c0_i32 : i32, i32
  }
  func.func @transform_3(%arg0: i32) -> (i32, i32) {
    %c0_i32 = arith.constant 0 : i32
    %c0_i32_0 = arith.constant 0 : i32
    return %arg0, %c0_i32 : i32, i32
  }
}

</mosaic_0001>

<llo_original>
// kernel: tpu_custom_call.1
$region0: #{tpu_custom_call.1}
  #allocation0 [shape = 'u32[]', space=smem, size = 0x4, offset = 0x4, fixed_abs, tag = 'smem constant byte address 0x4 - core index']
  #allocation1 [shape = 'u32[144,128]{1,0:T(1,128)}', space=vmem, size = 0x12000, scoped, tag = 'internal scratch']
  %s0 = inlined_call_operand.hbm [shape: bf16[512,1024], index: 0, kind: input, shape index: {}]
  %s1 = inlined_call_operand.hbm [shape: f32[1,1024], index: 1, kind: input, shape index: {}]
  %s2 = inlined_call_operand.hbm [shape: bf16[8,512], index: 2, kind: input, shape index: {}]
  %s3 = inlined_call_operand.hbm [shape: f32[8,512], index: 3, kind: output, shape index: {}]
  %s4 = sld [smem:[#allocation0]]
  $region34: #{tpu_custom_call.1} parent=0
    _
  %s6 = ssub.s32 1, %s4
  %s7 = scalar_select 0, %s6, %s4
  $region1: #{tpu_custom_call.1} parent=0
    #allocation2 [shape = 'u8[1048576]{0}', space=vmem, size = 0x100000, scoped, tag = 'input window, operand 0, single buffered']
    #allocation3 [shape = 's32[1]{0}', space=sflag, size = 0x4, scoped, tag = 'scoped memory for tpu_custom_call.1']
    #allocation4 [shape = 's32[1]{0}', space=sflag, size = 0x4, scoped, tag = 'scoped memory for tpu_custom_call.1']
    #allocation5 [shape = 'u8[4096]{0}', space=vmem, size = 0x1000, scoped, tag = 'input window, operand 1, single buffered']
    #allocation6 [shape = 's32[1]{0}', space=sflag, size = 0x4, scoped, tag = 'scoped memory for tpu_custom_call.1']
    #allocation7 [shape = 'u8[8192]{0}', space=vmem, size = 0x2000, scoped, tag = 'input window, operand 2, single buffered']
    #allocation8 [shape = 'u8[16384]{0}', space=vmem, size = 0x4000, scoped, tag = 'output window, operand 0, single buffered']
    %8 = vsyncpa [#allocation3], 0
    %9 = vsyncpa [#allocation6], 0
    %10 = vsyncpa [#allocation4], 0
    // Predicated region
    $region2: #{tpu_custom_call.1} parent=1 // pred_check
      _
    $region3: #{tpu_custom_call.1} parent=1 // pred_check_branch
      %12 = sbr.rel (0) target = $region5
    $region4: #{tpu_custom_call.1} parent=1 // pred_region
      %s14 = ssub.s32 32768, 32768
      %15 = vsyncadd [#allocation3], %s14
      %s16 = sshll.u32 [#allocation2], 4
      %s17 = int_to_ptr.vmem [resolvable:$true] %s16
      %22 = dma.hbm_to_vmem [thread:$0]  %s0, 32768, %s17, [#allocation3], 512, 512, 32
    $region5: #{tpu_custom_call.1} parent=1 // pred_fallthru
      _
    // Predicated region
    $region6: #{tpu_custom_call.1} parent=1 // pred_check
      _
    $region7: #{tpu_custom_call.1} parent=1 // pred_check_branch
      %24 = sbr.rel (0) target = $region9
    $region8: #{tpu_custom_call.1} parent=1 // pred_region
      %s26 = ssub.s32 128, 128
      %27 = vsyncadd [#allocation6], %s26
      %s29 = sshll.u32 [#allocation5], 4
      %s30 = int_to_ptr.vmem [resolvable:$true] %s29
      %32 = dma.hbm_to_vmem [thread:$0]  %s1, 128, %s30, [#allocation6]
    $region9: #{tpu_custom_call.1} parent=1 // pred_fallthru
      _
    // Predicated region
    $region10: #{tpu_custom_call.1} parent=1 // pred_check
      _
    $region11: #{tpu_custom_call.1} parent=1 // pred_check_branch
      %34 = sbr.rel (0) target = $region13
    $region12: #{tpu_custom_call.1} parent=1 // pred_region
      %s36 = ssub.s32 256, 256
      %37 = vsyncadd [#allocation6], %s36
      %s39 = sshll.u32 [#allocation7], 4
      %s40 = int_to_ptr.vmem [resolvable:$true] %s39
      %42 = dma.hbm_to_vmem [thread:$0]  %s2, 256, %s40, [#allocation6]
    $region13: #{tpu_custom_call.1} parent=1 // pred_fallthru
      _
    // Predicated region
    $region14: #{tpu_custom_call.1} parent=1 // pred_check
      _
    $region15: #{tpu_custom_call.1} parent=1 // pred_check_branch
      %44 = sbr.rel (0) target = $region17
    $region16: #{tpu_custom_call.1} parent=1 // pred_region
      %45 = dma.done [#allocation3], 32768
    $region17: #{tpu_custom_call.1} parent=1 // pred_fallthru
      _
    // Predicated region
    $region18: #{tpu_custom_call.1} parent=1 // pred_check
      _
    $region19: #{tpu_custom_call.1} parent=1 // pred_check_branch
      %47 = sbr.rel (0) target = $region21
    $region20: #{tpu_custom_call.1} parent=1 // pred_region
      %48 = dma.done [#allocation6], 128
    $region21: #{tpu_custom_call.1} parent=1 // pred_fallthru
      _
    // Predicated region
    $region22: #{tpu_custom_call.1} parent=1 // pred_check
      _
    $region23: #{tpu_custom_call.1} parent=1 // pred_check_branch
      %50 = sbr.rel (0) target = $region25
    $region24: #{tpu_custom_call.1} parent=1 // pred_region
      %51 = dma.done [#allocation6], 256
    $region25: #{tpu_custom_call.1} parent=1 // pred_fallthru
      _
    %v52 = vld [vmem:[#allocation7] sm:$0xff]
    %v53 = vld [vmem:[#allocation7 + $0x8] sm:$0xff]
    %v54 = vld [vmem:[#allocation2] sm:$0xff]
    %v55 = vld [vmem:[#allocation2 + $0x8] sm:$0xff]
    %v56 = vld [vmem:[#allocation2 + $0x10] sm:$0xff]
    %v57 = vld [vmem:[#allocation2 + $0x18] sm:$0xff]
    %v58 = vld [vmem:[#allocation2 + $0x20] sm:$0xff]
    %v59 = vld [vmem:[#allocation2 + $0x28] sm:$0xff]
    %v60 = vld [vmem:[#allocation2 + $0x30] sm:$0xff]
    %v61 = vld [vmem:[#allocation2 + $0x38] sm:$0xff]
    %v62 = vld [vmem:[#allocation2 + $0x40] sm:$0xff]
    %v63 = vld [vmem:[#allocation2 + $0x48] sm:$0xff]
    %v64 = vld [vmem:[#allocation2 + $0x50] sm:$0xff]
    %v65 = vld [vmem:[#allocation2 + $0x58] sm:$0xff]
    %v66 = vld [vmem:[#allocation2 + $0x60] sm:$0xff]
    %v67 = vld [vmem:[#allocation2 + $0x68] sm:$0xff]
    %v68 = vld [vmem:[#allocation2 + $0x70] sm:$0xff]
    %v69 = vld [vmem:[#allocation2 + $0x78] sm:$0xff]
    %v70 = vld [vmem:[#allocation2 + $0x80] sm:$0xff]
    %v71 = vld [vmem:[#allocation2 + $0x88] sm:$0xff]
    %v72 = vld [vmem:[#allocation2 + $0x90] sm:$0xff]
    %v73 = vld [vmem:[#allocation2 + $0x98] sm:$0xff]
    %v74 = vld [vmem:[#allocation2 + $0xa0] sm:$0xff]
    %v75 = vld [vmem:[#allocation2 + $0xa8] sm:$0xff]
    %v76 = vld [vmem:[#allocation2 + $0xb0] sm:$0xff]
    %v77 = vld [vmem:[#allocation2 + $0xb8] sm:$0xff]
    %v78 = vld [vmem:[#allocation2 + $0xc0] sm:$0xff]
    %v79 = vld [vmem:[#allocation2 + $0xc8] sm:$0xff]
    %v80 = vld [vmem:[#allocation2 + $0xd0] sm:$0xff]
    %v81 = vld [vmem:[#allocation2 + $0xd8] sm:$0xff]
    %v82 = vld [vmem:[#allocation2 + $0xe0] sm:$0xff]
    %v83 = vld [vmem:[#allocation2 + $0xe8] sm:$0xff]
    %v84 = vld [vmem:[#allocation2 + $0xf0] sm:$0xff]
    %v85 = vld [vmem:[#allocation2 + $0xf8] sm:$0xff]
    %v86 = vld [vmem:[#allocation2 + $0x100] sm:$0xff]
    %v87 = vld [vmem:[#allocation2 + $0x108] sm:$0xff]
    %v88 = vld [vmem:[#allocation2 + $0x110] sm:$0xff]
    %v89 = vld [vmem:[#allocation2 + $0x118] sm:$0xff]
    %v90 = vld [vmem:[#allocation2 + $0x120] sm:$0xff]
    %v91 = vld [vmem:[#allocation2 + $0x128] sm:$0xff]
    %v92 = vld [vmem:[#allocation2 + $0x130] sm:$0xff]
    %v93 = vld [vmem:[#allocation2 + $0x138] sm:$0xff]
    %v94 = vld [vmem:[#allocation2 + $0x140] sm:$0xff]
    %v95 = vld [vmem:[#allocation2 + $0x148] sm:$0xff]
    %v96 = vld [vmem:[#allocation2 + $0x150] sm:$0xff]
    %v97 = vld [vmem:[#allocation2 + $0x158] sm:$0xff]
    %v98 = vld [vmem:[#allocation2 + $0x160] sm:$0xff]
    %v99 = vld [vmem:[#allocation2 + $0x168] sm:$0xff]
    %v100 = vld [vmem:[#allocation2 + $0x170] sm:$0xff]
    %v101 = vld [vmem:[#allocation2 + $0x178] sm:$0xff]
    %v102 = vld [vmem:[#allocation2 + $0x180] sm:$0xff]
    %v103 = vld [vmem:[#allocation2 + $0x188] sm:$0xff]
    %v104 = vld [vmem:[#allocation2 + $0x190] sm:$0xff]
    %v105 = vld [vmem:[#allocation2 + $0x198] sm:$0xff]
    %v106 = vld [vmem:[#allocation2 + $0x1a0] sm:$0xff]
    %v107 = vld [vmem:[#allocation2 + $0x1a8] sm:$0xff]
    %v108 = vld [vmem:[#allocation2 + $0x1b0] sm:$0xff]
    %v109 = vld [vmem:[#allocation2 + $0x1b8] sm:$0xff]
    %v110 = vld [vmem:[#allocation2 + $0x1c0] sm:$0xff]
    %v111 = vld [vmem:[#allocation2 + $0x1c8] sm:$0xff]
    %v112 = vld [vmem:[#allocation2 + $0x1d0] sm:$0xff]
    %v113 = vld [vmem:[#allocation2 + $0x1d8] sm:$0xff]
    %v114 = vld [vmem:[#allocation2 + $0x1e0] sm:$0xff]
    %v115 = vld [vmem:[#allocation2 + $0x1e8] sm:$0xff]
    %v116 = vld [vmem:[#allocation2 + $0x1f0] sm:$0xff]
    %v117 = vld [vmem:[#allocation2 + $0x1f8] sm:$0xff]
    %v118 = vld [vmem:[#allocation2 + $0x200] sm:$0xff]
    %v119 = vld [vmem:[#allocation2 + $0x208] sm:$0xff]
    %v120 = vld [vmem:[#allocation2 + $0x210] sm:$0xff]
    %v121 = vld [vmem:[#allocation2 + $0x218] sm:$0xff]
    %v122 = vld [vmem:[#allocation2 + $0x220] sm:$0xff]
    %v123 = vld [vmem:[#allocation2 + $0x228] sm:$0xff]
    %v124 = vld [vmem:[#allocation2 + $0x230] sm:$0xff]
    %v125 = vld [vmem:[#allocation2 + $0x238] sm:$0xff]
    %v126 = vld [vmem:[#allocation2 + $0x240] sm:$0xff]
    %v127 = vld [vmem:[#allocation2 + $0x248] sm:$0xff]
    %v128 = vld [vmem:[#allocation2 + $0x250] sm:$0xff]
    %v129 = vld [vmem:[#allocation2 + $0x258] sm:$0xff]
    %v130 = vld [vmem:[#allocation2 + $0x260] sm:$0xff]
    %v131 = vld [vmem:[#allocation2 + $0x268] sm:$0xff]
    %v132 = vld [vmem:[#allocation2 + $0x270] sm:$0xff]
    %v133 = vld [vmem:[#allocation2 + $0x278] sm:$0xff]
    %v134 = vld [vmem:[#allocation2 + $0x280] sm:$0xff]
    %v135 = vld [vmem:[#allocation2 + $0x288] sm:$0xff]
    %v136 = vld [vmem:[#allocation2 + $0x290] sm:$0xff]
    %v137 = vld [vmem:[#allocation2 + $0x298] sm:$0xff]
    %v138 = vld [vmem:[#allocation2 + $0x2a0] sm:$0xff]
    %v139 = vld [vmem:[#allocation2 + $0x2a8] sm:$0xff]
    %v140 = vld [vmem:[#allocation2 + $0x2b0] sm:$0xff]
    %v141 = vld [vmem:[#allocation2 + $0x2b8] sm:$0xff]
    %v142 = vld [vmem:[#allocation2 + $0x2c0] sm:$0xff]
    %v143 = vld [vmem:[#allocation2 + $0x2c8] sm:$0xff]
    %v144 = vld [vmem:[#allocation2 + $0x2d0] sm:$0xff]
    %v145 = vld [vmem:[#allocation2 + $0x2d8] sm:$0xff]
    %v146 = vld [vmem:[#allocation2 + $0x2e0] sm:$0xff]
    %v147 = vld [vmem:[#allocation2 + $0x2e8] sm:$0xff]
    %v148 = vld [vmem:[#allocation2 + $0x2f0] sm:$0xff]
    %v149 = vld [vmem:[#allocation2 + $0x2f8] sm:$0xff]
    %v150 = vld [vmem:[#allocation2 + $0x300] sm:$0xff]
    %v151 = vld [vmem:[#allocation2 + $0x308] sm:$0xff]
    %v152 = vld [vmem:[#allocation2 + $0x310] sm:$0xff]
    %v153 = vld [vmem:[#allocation2 + $0x318] sm:$0xff]
    %v154 = vld [vmem:[#allocation2 + $0x320] sm:$0xff]
    %v155 = vld [vmem:[#allocation2 + $0x328] sm:$0xff]
    %v156 = vld [vmem:[#allocation2 + $0x330] sm:$0xff]
    %v157 = vld [vmem:[#allocation2 + $0x338] sm:$0xff]
    %v158 = vld [vmem:[#allocation2 + $0x340] sm:$0xff]
    %v159 = vld [vmem:[#allocation2 + $0x348] sm:$0xff]
    %v160 = vld [vmem:[#allocation2 + $0x350] sm:$0xff]
    %v161 = vld [vmem:[#allocation2 + $0x358] sm:$0xff]
    %v162 = vld [vmem:[#allocation2 + $0x360] sm:$0xff]
    %v163 = vld [vmem:[#allocation2 + $0x368] sm:$0xff]
    %v164 = vld [vmem:[#allocation2 + $0x370] sm:$0xff]
    %v165 = vld [vmem:[#allocation2 + $0x378] sm:$0xff]
    %v166 = vld [vmem:[#allocation2 + $0x380] sm:$0xff]
    %v167 = vld [vmem:[#allocation2 + $0x388] sm:$0xff]
    %v168 = vld [vmem:[#allocation2 + $0x390] sm:$0xff]
    %v169 = vld [vmem:[#allocation2 + $0x398] sm:$0xff]
    %v170 = vld [vmem:[#allocation2 + $0x3a0] sm:$0xff]
    %v171 = vld [vmem:[#allocation2 + $0x3a8] sm:$0xff]
    %v172 = vld [vmem:[#allocation2 + $0x3b0] sm:$0xff]
    %v173 = vld [vmem:[#allocation2 + $0x3b8] sm:$0xff]
    %v174 = vld [vmem:[#allocation2 + $0x3c0] sm:$0xff]
    %v175 = vld [vmem:[#allocation2 + $0x3c8] sm:$0xff]
    %v176 = vld [vmem:[#allocation2 + $0x3d0] sm:$0xff]
    %v177 = vld [vmem:[#allocation2 + $0x3d8] sm:$0xff]
    %v178 = vld [vmem:[#allocation2 + $0x3e0] sm:$0xff]
    %v179 = vld [vmem:[#allocation2 + $0x3e8] sm:$0xff]
    %v180 = vld [vmem:[#allocation2 + $0x3f0] sm:$0xff]
    %v181 = vld [vmem:[#allocation2 + $0x3f8] sm:$0xff]
    %v182 = vld [vmem:[#allocation2 + $0x400] sm:$0xff]
    %v183 = vld [vmem:[#allocation2 + $0x408] sm:$0xff]
    %v184 = vld [vmem:[#allocation2 + $0x410] sm:$0xff]
    %v185 = vld [vmem:[#allocation2 + $0x418] sm:$0xff]
    %v186 = vld [vmem:[#allocation2 + $0x420] sm:$0xff]
    %v187 = vld [vmem:[#allocation2 + $0x428] sm:$0xff]
    %v188 = vld [vmem:[#allocation2 + $0x430] sm:$0xff]
    %v189 = vld [vmem:[#allocation2 + $0x438] sm:$0xff]
    %v190 = vld [vmem:[#allocation2 + $0x440] sm:$0xff]
    %v191 = vld [vmem:[#allocation2 + $0x448] sm:$0xff]
    %v192 = vld [vmem:[#allocation2 + $0x450] sm:$0xff]
    %v193 = vld [vmem:[#allocation2 + $0x458] sm:$0xff]
    %v194 = vld [vmem:[#allocation2 + $0x460] sm:$0xff]
    %v195 = vld [vmem:[#allocation2 + $0x468] sm:$0xff]
    %v196 = vld [vmem:[#allocation2 + $0x470] sm:$0xff]
    %v197 = vld [vmem:[#allocation2 + $0x478] sm:$0xff]
    %v198 = vld [vmem:[#allocation2 + $0x480] sm:$0xff]
    %v199 = vld [vmem:[#allocation2 + $0x488] sm:$0xff]
    %v200 = vld [vmem:[#allocation2 + $0x490] sm:$0xff]
    %v201 = vld [vmem:[#allocation2 + $0x498] sm:$0xff]
    %v202 = vld [vmem:[#allocation2 + $0x4a0] sm:$0xff]
    %v203 = vld [vmem:[#allocation2 + $0x4a8] sm:$0xff]
    %v204 = vld [vmem:[#allocation2 + $0x4b0] sm:$0xff]
    %v205 = vld [vmem:[#allocation2 + $0x4b8] sm:$0xff]
    %v206 = vld [vmem:[#allocation2 + $0x4c0] sm:$0xff]
    %v207 = vld [vmem:[#allocation2 + $0x4c8] sm:$0xff]
    %v208 = vld [vmem:[#allocation2 + $0x4d0] sm:$0xff]
    %v209 = vld [vmem:[#allocation2 + $0x4d8] sm:$0xff]
    %v210 = vld [vmem:[#allocation2 + $0x4e0] sm:$0xff]
    %v211 = vld [vmem:[#allocation2 + $0x4e8] sm:$0xff]
    %v212 = vld [vmem:[#allocation2 + $0x4f0] sm:$0xff]
    %v213 = vld [vmem:[#allocation2 + $0x4f8] sm:$0xff]
    %v214 = vld [vmem:[#allocation2 + $0x500] sm:$0xff]
    %v215 = vld [vmem:[#allocation2 + $0x508] sm:$0xff]
    %v216 = vld [vmem:[#allocation2 + $0x510] sm:$0xff]
    %v217 = vld [vmem:[#allocation2 + $0x518] sm:$0xff]
    %v218 = vld [vmem:[#allocation2 + $0x520] sm:$0xff]
    %v219 = vld [vmem:[#allocation2 + $0x528] sm:$0xff]
    %v220 = vld [vmem:[#allocation2 + $0x530] sm:$0xff]
    %v221 = vld [vmem:[#allocation2 + $0x538] sm:$0xff]
    %v222 = vld [vmem:[#allocation2 + $0x540] sm:$0xff]
    %v223 = vld [vmem:[#allocation2 + $0x548] sm:$0xff]
    %v224 = vld [vmem:[#allocation2 + $0x550] sm:$0xff]
    %v225 = vld [vmem:[#allocation2 + $0x558] sm:$0xff]
    %v226 = vld [vmem:[#allocation2 + $0x560] sm:$0xff]
    %v227 = vld [vmem:[#allocation2 + $0x568] sm:$0xff]
    %v228 = vld [vmem:[#allocation2 + $0x570] sm:$0xff]
    %v229 = vld [vmem:[#allocation2 + $0x578] sm:$0xff]
    %v230 = vld [vmem:[#allocation2 + $0x580] sm:$0xff]
    %v231 = vld [vmem:[#allocation2 + $0x588] sm:$0xff]
    %v232 = vld [vmem:[#allocation2 + $0x590] sm:$0xff]
    %v233 = vld [vmem:[#allocation2 + $0x598] sm:$0xff]
    %v234 = vld [vmem:[#allocation2 + $0x5a0] sm:$0xff]
    %v235 = vld [vmem:[#allocation2 + $0x5a8] sm:$0xff]
    %v236 = vld [vmem:[#allocation2 + $0x5b0] sm:$0xff]
    %v237 = vld [vmem:[#allocation2 + $0x5b8] sm:$0xff]
    %v238 = vld [vmem:[#allocation2 + $0x5c0] sm:$0xff]
    %v239 = vld [vmem:[#allocation2 + $0x5c8] sm:$0xff]
    %v240 = vld [vmem:[#allocation2 + $0x5d0] sm:$0xff]
    %v241 = vld [vmem:[#allocation2 + $0x5d8] sm:$0xff]
    %v242 = vld [vmem:[#allocation2 + $0x5e0] sm:$0xff]
    %v243 = vld [vmem:[#allocation2 + $0x5e8] sm:$0xff]
    %v244 = vld [vmem:[#allocation2 + $0x5f0] sm:$0xff]
    %v245 = vld [vmem:[#allocation2 + $0x5f8] sm:$0xff]
    %v246 = vld [vmem:[#allocation2 + $0x600] sm:$0xff]
    %v247 = vld [vmem:[#allocation2 + $0x608] sm:$0xff]
    %v248 = vld [vmem:[#allocation2 + $0x610] sm:$0xff]
    %v249 = vld [vmem:[#allocation2 + $0x618] sm:$0xff]
    %v250 = vld [vmem:[#allocation2 + $0x620] sm:$0xff]
    %v251 = vld [vmem:[#allocation2 + $0x628] sm:$0xff]
    %v252 = vld [vmem:[#allocation2 + $0x630] sm:$0xff]
    %v253 = vld [vmem:[#allocation2 + $0x638] sm:$0xff]
    %v254 = vld [vmem:[#allocation2 + $0x640] sm:$0xff]
    %v255 = vld [vmem:[#allocation2 + $0x648] sm:$0xff]
    %v256 = vld [vmem:[#allocation2 + $0x650] sm:$0xff]
    %v257 = vld [vmem:[#allocation2 + $0x658] sm:$0xff]
    %v258 = vld [vmem:[#allocation2 + $0x660] sm:$0xff]
    %v259 = vld [vmem:[#allocation2 + $0x668] sm:$0xff]
    %v260 = vld [vmem:[#allocation2 + $0x670] sm:$0xff]
    %v261 = vld [vmem:[#allocation2 + $0x678] sm:$0xff]
    %v262 = vld [vmem:[#allocation2 + $0x680] sm:$0xff]
    %v263 = vld [vmem:[#allocation2 + $0x688] sm:$0xff]
    %v264 = vld [vmem:[#allocation2 + $0x690] sm:$0xff]
    %v265 = vld [vmem:[#allocation2 + $0x698] sm:$0xff]
    %v266 = vld [vmem:[#allocation2 + $0x6a0] sm:$0xff]
    %v267 = vld [vmem:[#allocation2 + $0x6a8] sm:$0xff]
    %v268 = vld [vmem:[#allocation2 + $0x6b0] sm:$0xff]
    %v269 = vld [vmem:[#allocation2 + $0x6b8] sm:$0xff]
    %v270 = vld [vmem:[#allocation2 + $0x6c0] sm:$0xff]
    %v271 = vld [vmem:[#allocation2 + $0x6c8] sm:$0xff]
    %v272 = vld [vmem:[#allocation2 + $0x6d0] sm:$0xff]
    %v273 = vld [vmem:[#allocation2 + $0x6d8] sm:$0xff]
    %v274 = vld [vmem:[#allocation2 + $0x6e0] sm:$0xff]
    %v275 = vld [vmem:[#allocation2 + $0x6e8] sm:$0xff]
    %v276 = vld [vmem:[#allocation2 + $0x6f0] sm:$0xff]
    %v277 = vld [vmem:[#allocation2 + $0x6f8] sm:$0xff]
    %v278 = vld [vmem:[#allocation2 + $0x700] sm:$0xff]
    %v279 = vld [vmem:[#allocation2 + $0x708] sm:$0xff]
    %v280 = vld [vmem:[#allocation2 + $0x710] sm:$0xff]
    %v281 = vld [vmem:[#allocation2 + $0x718] sm:$0xff]
    %v282 = vld [vmem:[#allocation2 + $0x720] sm:$0xff]
    %v283 = vld [vmem:[#allocation2 + $0x728] sm:$0xff]
    %v284 = vld [vmem:[#allocation2 + $0x730] sm:$0xff]
    %v285 = vld [vmem:[#allocation2 + $0x738] sm:$0xff]
    %v286 = vld [vmem:[#allocation2 + $0x740] sm:$0xff]
    %v287 = vld [vmem:[#allocation2 + $0x748] sm:$0xff]
    %v288 = vld [vmem:[#allocation2 + $0x750] sm:$0xff]
    %v289 = vld [vmem:[#allocation2 + $0x758] sm:$0xff]
    %v290 = vld [vmem:[#allocation2 + $0x760] sm:$0xff]
    %v291 = vld [vmem:[#allocation2 + $0x768] sm:$0xff]
    %v292 = vld [vmem:[#allocation2 + $0x770] sm:$0xff]
    %v293 = vld [vmem:[#allocation2 + $0x778] sm:$0xff]
    %v294 = vld [vmem:[#allocation2 + $0x780] sm:$0xff]
    %v295 = vld [vmem:[#allocation2 + $0x788] sm:$0xff]
    %v296 = vld [vmem:[#allocation2 + $0x790] sm:$0xff]
    %v297 = vld [vmem:[#allocation2 + $0x798] sm:$0xff]
    %v298 = vld [vmem:[#allocation2 + $0x7a0] sm:$0xff]
    %v299 = vld [vmem:[#allocation2 + $0x7a8] sm:$0xff]
    %v300 = vld [vmem:[#allocation2 + $0x7b0] sm:$0xff]
    %v301 = vld [vmem:[#allocation2 + $0x7b8] sm:$0xff]
    %v302 = vld [vmem:[#allocation2 + $0x7c0] sm:$0xff]
    %v303 = vld [vmem:[#allocation2 + $0x7c8] sm:$0xff]
    %v304 = vld [vmem:[#allocation2 + $0x7d0] sm:$0xff]
    %v305 = vld [vmem:[#allocation2 + $0x7d8] sm:$0xff]
    %v306 = vld [vmem:[#allocation2 + $0x7e0] sm:$0xff]
    %v307 = vld [vmem:[#allocation2 + $0x7e8] sm:$0xff]
    %v308 = vld [vmem:[#allocation2 + $0x7f0] sm:$0xff]
    %v309 = vld [vmem:[#allocation2 + $0x7f8] sm:$0xff]
    %v310 = vld [vmem:[#allocation5] sm:$0xff]
    %v312 = vlaneseq
    %v313 = vshrl.u32 %v312, 7
    %v314 = vsub.s32 0, %v313
    %v315 = vrot.slane %v310, %v314
    %v316 = vlaneseq
    %v317 = vshrl.u32 %v316, 7
    %v318 = vsub.s32 1, %v317
    %v319 = vrot.slane %v310, %v318
    %v320 = vlaneseq
    %v321 = vshrl.u32 %v320, 7
    %v322 = vsub.s32 2, %v321
    %v323 = vrot.slane %v310, %v322
    %v324 = vlaneseq
    %v325 = vshrl.u32 %v324, 7
    %v326 = vsub.s32 3, %v325
    %v327 = vrot.slane %v310, %v326
    %v328 = vlaneseq
    %v329 = vshrl.u32 %v328, 7
    %v330 = vsub.s32 4, %v329
    %v331 = vrot.slane %v310, %v330
    %v332 = vlaneseq
    %v333 = vshrl.u32 %v332, 7
    %v334 = vsub.s32 5, %v333
    %v335 = vrot.slane %v310, %v334
    %v336 = vlaneseq
    %v337 = vshrl.u32 %v336, 7
    %v338 = vsub.s32 6, %v337
    %v339 = vrot.slane %v310, %v338
    %v340 = vlaneseq
    %v341 = vshrl.u32 %v340, 7
    %v342 = vsub.s32 7, %v341
    %v343 = vrot.slane %v310, %v342
    %v354 = vunpack.c.l.b16 %v52
    %v355 = vunpack.c.h.b16 %v52
    %v356 = vunpack.c.l.b16 %v53
    %v357 = vunpack.c.h.b16 %v53
    %v358 = vpack.c.b16 %v354, %v354
    %v359 = vpack.c.b16 %v355, %v355
    %v360 = vpack.c.b16 %v356, %v356
    %v361 = vpack.c.b16 %v357, %v357
    %v622 = vunpack.c.l.b16 %v54
    %v623 = vunpack.c.h.b16 %v54
    %v624 = vunpack.c.l.b16 %v55
    %v625 = vunpack.c.h.b16 %v55
    %v626 = vunpack.c.l.b16 %v56
    %v627 = vunpack.c.h.b16 %v56
    %v628 = vunpack.c.l.b16 %v57
    %v629 = vunpack.c.h.b16 %v57
    %v630 = vunpack.c.l.b16 %v58
    %v631 = vunpack.c.h.b16 %v58
    %v632 = vunpack.c.l.b16 %v59
    %v633 = vunpack.c.h.b16 %v59
    %v634 = vunpack.c.l.b16 %v60
    %v635 = vunpack.c.h.b16 %v60
    %v636 = vunpack.c.l.b16 %v61
    %v637 = vunpack.c.h.b16 %v61
    %v638 = vunpack.c.l.b16 %v62
    %v639 = vunpack.c.h.b16 %v62
    %v640 = vunpack.c.l.b16 %v63
    %v641 = vunpack.c.h.b16 %v63
    %v642 = vunpack.c.l.b16 %v64
    %v643 = vunpack.c.h.b16 %v64
    %v644 = vunpack.c.l.b16 %v65
    %v645 = vunpack.c.h.b16 %v65
    %v646 = vunpack.c.l.b16 %v66
    %v647 = vunpack.c.h.b16 %v66
    %v648 = vunpack.c.l.b16 %v67
    %v649 = vunpack.c.h.b16 %v67
    %v650 = vunpack.c.l.b16 %v68
    %v651 = vunpack.c.h.b16 %v68
    %v652 = vunpack.c.l.b16 %v69
    %v653 = vunpack.c.h.b16 %v69
    %v654 = vunpack.c.l.b16 %v70
    %v655 = vunpack.c.h.b16 %v70
    %v656 = vunpack.c.l.b16 %v71
    %v657 = vunpack.c.h.b16 %v71
    %v658 = vunpack.c.l.b16 %v72
    %v659 = vunpack.c.h.b16 %v72
    %v660 = vunpack.c.l.b16 %v73
    %v661 = vunpack.c.h.b16 %v73
    %v662 = vunpack.c.l.b16 %v74
    %v663 = vunpack.c.h.b16 %v74
    %v664 = vunpack.c.l.b16 %v75
    %v665 = vunpack.c.h.b16 %v75
    %v666 = vunpack.c.l.b16 %v76
    %v667 = vunpack.c.h.b16 %v76
    %v668 = vunpack.c.l.b16 %v77
    %v669 = vunpack.c.h.b16 %v77
    %v670 = vunpack.c.l.b16 %v78
    %v671 = vunpack.c.h.b16 %v78
    %v672 = vunpack.c.l.b16 %v79
    %v673 = vunpack.c.h.b16 %v79
    %v674 = vunpack.c.l.b16 %v80
    %v675 = vunpack.c.h.b16 %v80
    %v676 = vunpack.c.l.b16 %v81
    %v677 = vunpack.c.h.b16 %v81
    %v678 = vunpack.c.l.b16 %v82
    %v679 = vunpack.c.h.b16 %v82
    %v680 = vunpack.c.l.b16 %v83
    %v681 = vunpack.c.h.b16 %v83
    %v682 = vunpack.c.l.b16 %v84
    %v683 = vunpack.c.h.b16 %v84
    %v684 = vunpack.c.l.b16 %v85
    %v685 = vunpack.c.h.b16 %v85
    %v686 = vunpack.c.l.b16 %v86
    %v687 = vunpack.c.h.b16 %v86
    %v688 = vunpack.c.l.b16 %v87
    %v689 = vunpack.c.h.b16 %v87
    %v690 = vunpack.c.l.b16 %v88
    %v691 = vunpack.c.h.b16 %v88
    %v692 = vunpack.c.l.b16 %v89
    %v693 = vunpack.c.h.b16 %v89
    %v694 = vunpack.c.l.b16 %v90
    %v695 = vunpack.c.h.b16 %v90
    %v696 = vunpack.c.l.b16 %v91
    %v697 = vunpack.c.h.b16 %v91
    %v698 = vunpack.c.l.b16 %v92
    %v699 = vunpack.c.h.b16 %v92
    %v700 = vunpack.c.l.b16 %v93
    %v701 = vunpack.c.h.b16 %v93
    %v702 = vunpack.c.l.b16 %v94
    %v703 = vunpack.c.h.b16 %v94
    %v704 = vunpack.c.l.b16 %v95
    %v705 = vunpack.c.h.b16 %v95
    %v706 = vunpack.c.l.b16 %v96
    %v707 = vunpack.c.h.b16 %v96
    %v708 = vunpack.c.l.b16 %v97
    %v709 = vunpack.c.h.b16 %v97
    %v710 = vunpack.c.l.b16 %v98
    %v711 = vunpack.c.h.b16 %v98
    %v712 = vunpack.c.l.b16 %v99
    %v713 = vunpack.c.h.b16 %v99
    %v714 = vunpack.c.l.b16 %v100
    %v715 = vunpack.c.h.b16 %v100
    %v716 = vunpack.c.l.b16 %v101
    %v717 = vunpack.c.h.b16 %v101
    %v718 = vunpack.c.l.b16 %v102
    %v719 = vunpack.c.h.b16 %v102
    %v720 = vunpack.c.l.b16 %v103
    %v721 = vunpack.c.h.b16 %v103
    %v722 = vunpack.c.l.b16 %v104
    %v723 = vunpack.c.h.b16 %v104
    %v724 = vunpack.c.l.b16 %v105
    %v725 = vunpack.c.h.b16 %v105
    %v726 = vunpack.c.l.b16 %v106
    %v727 = vunpack.c.h.b16 %v106
    %v728 = vunpack.c.l.b16 %v107
    %v729 = vunpack.c.h.b16 %v107
    %v730 = vunpack.c.l.b16 %v108
    %v731 = vunpack.c.h.b16 %v108
    %v732 = vunpack.c.l.b16 %v109
    %v733 = vunpack.c.h.b16 %v109
    %v734 = vunpack.c.l.b16 %v110
    %v735 = vunpack.c.h.b16 %v110
    %v736 = vunpack.c.l.b16 %v111
    %v737 = vunpack.c.h.b16 %v111
    %v738 = vunpack.c.l.b16 %v112
    %v739 = vunpack.c.h.b16 %v112
    %v740 = vunpack.c.l.b16 %v113
    %v741 = vunpack.c.h.b16 %v113
    %v742 = vunpack.c.l.b16 %v114
    %v743 = vunpack.c.h.b16 %v114
    %v744 = vunpack.c.l.b16 %v115
    %v745 = vunpack.c.h.b16 %v115
    %v746 = vunpack.c.l.b16 %v116
    %v747 = vunpack.c.h.b16 %v116
    %v748 = vunpack.c.l.b16 %v117
    %v749 = vunpack.c.h.b16 %v117
    %v750 = vunpack.c.l.b16 %v118
    %v751 = vunpack.c.h.b16 %v118
    %v752 = vunpack.c.l.b16 %v119
    %v753 = vunpack.c.h.b16 %v119
    %v754 = vunpack.c.l.b16 %v120
    %v755 = vunpack.c.h.b16 %v120
    %v756 = vunpack.c.l.b16 %v121
    %v757 = vunpack.c.h.b16 %v121
    %v758 = vunpack.c.l.b16 %v122
    %v759 = vunpack.c.h.b16 %v122
    %v760 = vunpack.c.l.b16 %v123
    %v761 = vunpack.c.h.b16 %v123
    %v762 = vunpack.c.l.b16 %v124
    %v763 = vunpack.c.h.b16 %v124
    %v764 = vunpack.c.l.b16 %v125
    %v765 = vunpack.c.h.b16 %v125
    %v766 = vunpack.c.l.b16 %v126
    %v767 = vunpack.c.h.b16 %v126
    %v768 = vunpack.c.l.b16 %v127
    %v769 = vunpack.c.h.b16 %v127
    %v770 = vunpack.c.l.b16 %v128
    %v771 = vunpack.c.h.b16 %v128
    %v772 = vunpack.c.l.b16 %v129
    %v773 = vunpack.c.h.b16 %v129
    %v774 = vunpack.c.l.b16 %v130
    %v775 = vunpack.c.h.b16 %v130
    %v776 = vunpack.c.l.b16 %v131
    %v777 = vunpack.c.h.b16 %v131
    %v778 = vunpack.c.l.b16 %v132
    %v779 = vunpack.c.h.b16 %v132
    %v780 = vunpack.c.l.b16 %v133
    %v781 = vunpack.c.h.b16 %v133
    %v782 = vunpack.c.l.b16 %v134
    %v783 = vunpack.c.h.b16 %v134
    %v784 = vunpack.c.l.b16 %v135
    %v785 = vunpack.c.h.b16 %v135
    %v786 = vunpack.c.l.b16 %v136
    %v787 = vunpack.c.h.b16 %v136
    %v788 = vunpack.c.l.b16 %v137
    %v789 = vunpack.c.h.b16 %v137
    %v790 = vunpack.c.l.b16 %v138
    %v791 = vunpack.c.h.b16 %v138
    %v792 = vunpack.c.l.b16 %v139
    %v793 = vunpack.c.h.b16 %v139
    %v794 = vunpack.c.l.b16 %v140
    %v795 = vunpack.c.h.b16 %v140
    %v796 = vunpack.c.l.b16 %v141
    %v797 = vunpack.c.h.b16 %v141
    %v798 = vunpack.c.l.b16 %v142
    %v799 = vunpack.c.h.b16 %v142
    %v800 = vunpack.c.l.b16 %v143
    %v801 = vunpack.c.h.b16 %v143
    %v802 = vunpack.c.l.b16 %v144
    %v803 = vunpack.c.h.b16 %v144
    %v804 = vunpack.c.l.b16 %v145
    %v805 = vunpack.c.h.b16 %v145
    %v806 = vunpack.c.l.b16 %v146
    %v807 = vunpack.c.h.b16 %v146
    %v808 = vunpack.c.l.b16 %v147
    %v809 = vunpack.c.h.b16 %v147
    %v810 = vunpack.c.l.b16 %v148
    %v811 = vunpack.c.h.b16 %v148
    %v812 = vunpack.c.l.b16 %v149
    %v813 = vunpack.c.h.b16 %v149
    %v814 = vunpack.c.l.b16 %v150
    %v815 = vunpack.c.h.b16 %v150
    %v816 = vunpack.c.l.b16 %v151
    %v817 = vunpack.c.h.b16 %v151
    %v818 = vunpack.c.l.b16 %v152
    %v819 = vunpack.c.h.b16 %v152
    %v820 = vunpack.c.l.b16 %v153
    %v821 = vunpack.c.h.b16 %v153
    %v822 = vunpack.c.l.b16 %v154
    %v823 = vunpack.c.h.b16 %v154
    %v824 = vunpack.c.l.b16 %v155
    %v825 = vunpack.c.h.b16 %v155
    %v826 = vunpack.c.l.b16 %v156
    %v827 = vunpack.c.h.b16 %v156
    %v828 = vunpack.c.l.b16 %v157
    %v829 = vunpack.c.h.b16 %v157
    %v830 = vunpack.c.l.b16 %v158
    %v831 = vunpack.c.h.b16 %v158
    %v832 = vunpack.c.l.b16 %v159
    %v833 = vunpack.c.h.b16 %v159
    %v834 = vunpack.c.l.b16 %v160
    %v835 = vunpack.c.h.b16 %v160
    %v836 = vunpack.c.l.b16 %v161
    %v837 = vunpack.c.h.b16 %v161
    %v838 = vunpack.c.l.b16 %v162
    %v839 = vunpack.c.h.b16 %v162
    %v840 = vunpack.c.l.b16 %v163
    %v841 = vunpack.c.h.b16 %v163
    %v842 = vunpack.c.l.b16 %v164
    %v843 = vunpack.c.h.b16 %v164
    %v844 = vunpack.c.l.b16 %v165
    %v845 = vunpack.c.h.b16 %v165
    %v846 = vunpack.c.l.b16 %v166
    %v847 = vunpack.c.h.b16 %v166
    %v848 = vunpack.c.l.b16 %v167
    %v849 = vunpack.c.h.b16 %v167
    %v850 = vunpack.c.l.b16 %v168
    %v851 = vunpack.c.h.b16 %v168
    %v852 = vunpack.c.l.b16 %v169
    %v853 = vunpack.c.h.b16 %v169
    %v854 = vunpack.c.l.b16 %v170
    %v855 = vunpack.c.h.b16 %v170
    %v856 = vunpack.c.l.b16 %v171
    %v857 = vunpack.c.h.b16 %v171
    %v858 = vunpack.c.l.b16 %v172
    %v859 = vunpack.c.h.b16 %v172
    %v860 = vunpack.c.l.b16 %v173
    %v861 = vunpack.c.h.b16 %v173
    %v862 = vunpack.c.l.b16 %v174
    %v863 = vunpack.c.h.b16 %v174
    %v864 = vunpack.c.l.b16 %v175
    %v865 = vunpack.c.h.b16 %v175
    %v866 = vunpack.c.l.b16 %v176
    %v867 = vunpack.c.h.b16 %v176
    %v868 = vunpack.c.l.b16 %v177
    %v869 = vunpack.c.h.b16 %v177
    %v870 = vunpack.c.l.b16 %v178
    %v871 = vunpack.c.h.b16 %v178
    %v872 = vunpack.c.l.b16 %v179
    %v873 = vunpack.c.h.b16 %v179
    %v874 = vunpack.c.l.b16 %v180
    %v875 = vunpack.c.h.b16 %v180
    %v876 = vunpack.c.l.b16 %v181
    %v877 = vunpack.c.h.b16 %v181
    %v878 = vunpack.c.l.b16 %v182
    %v879 = vunpack.c.h.b16 %v182
    %v880 = vunpack.c.l.b16 %v183
    %v881 = vunpack.c.h.b16 %v183
    %v882 = vunpack.c.l.b16 %v184
    %v883 = vunpack.c.h.b16 %v184
    %v884 = vunpack.c.l.b16 %v185
    %v885 = vunpack.c.h.b16 %v185
    %v886 = vunpack.c.l.b16 %v186
    %v887 = vunpack.c.h.b16 %v186
    %v888 = vunpack.c.l.b16 %v187
    %v889 = vunpack.c.h.b16 %v187
    %v890 = vunpack.c.l.b16 %v188
    %v891 = vunpack.c.h.b16 %v188
    %v892 = vunpack.c.l.b16 %v189
    %v893 = vunpack.c.h.b16 %v189
    %v894 = vunpack.c.l.b16 %v190
    %v895 = vunpack.c.h.b16 %v190
    %v896 = vunpack.c.l.b16 %v191
    %v897 = vunpack.c.h.b16 %v191
    %v898 = vunpack.c.l.b16 %v192
    %v899 = vunpack.c.h.b16 %v192
    %v900 = vunpack.c.l.b16 %v193
    %v901 = vunpack.c.h.b16 %v193
    %v902 = vunpack.c.l.b16 %v194
    %v903 = vunpack.c.h.b16 %v194
    %v904 = vunpack.c.l.b16 %v195
    %v905 = vunpack.c.h.b16 %v195
    %v906 = vunpack.c.l.b16 %v196
    %v907 = vunpack.c.h.b16 %v196
    %v908 = vunpack.c.l.b16 %v197
    %v909 = vunpack.c.h.b16 %v197
    %v910 = vunpack.c.l.b16 %v198
    %v911 = vunpack.c.h.b16 %v198
    %v912 = vunpack.c.l.b16 %v199
    %v913 = vunpack.c.h.b16 %v199
    %v914 = vunpack.c.l.b16 %v200
    %v915 = vunpack.c.h.b16 %v200
    %v916 = vunpack.c.l.b16 %v201
    %v917 = vunpack.c.h.b16 %v201
    %v918 = vunpack.c.l.b16 %v202
    %v919 = vunpack.c.h.b16 %v202
    %v920 = vunpack.c.l.b16 %v203
    %v921 = vunpack.c.h.b16 %v203
    %v922 = vunpack.c.l.b16 %v204
    %v923 = vunpack.c.h.b16 %v204
    %v924 = vunpack.c.l.b16 %v205
    %v925 = vunpack.c.h.b16 %v205
    %v926 = vunpack.c.l.b16 %v206
    %v927 = vunpack.c.h.b16 %v206
    %v928 = vunpack.c.l.b16 %v207
    %v929 = vunpack.c.h.b16 %v207
    %v930 = vunpack.c.l.b16 %v208
    %v931 = vunpack.c.h.b16 %v208
    %v932 = vunpack.c.l.b16 %v209
    %v933 = vunpack.c.h.b16 %v209
    %v934 = vunpack.c.l.b16 %v210
    %v935 = vunpack.c.h.b16 %v210
    %v936 = vunpack.c.l.b16 %v211
    %v937 = vunpack.c.h.b16 %v211
    %v938 = vunpack.c.l.b16 %v212
    %v939 = vunpack.c.h.b16 %v212
    %v940 = vunpack.c.l.b16 %v213
    %v941 = vunpack.c.h.b16 %v213
    %v942 = vunpack.c.l.b16 %v214
    %v943 = vunpack.c.h.b16 %v214
    %v944 = vunpack.c.l.b16 %v215
    %v945 = vunpack.c.h.b16 %v215
    %v946 = vunpack.c.l.b16 %v216
    %v947 = vunpack.c.h.b16 %v216
    %v948 = vunpack.c.l.b16 %v217
    %v949 = vunpack.c.h.b16 %v217
    %v950 = vunpack.c.l.b16 %v218
    %v951 = vunpack.c.h.b16 %v218
    %v952 = vunpack.c.l.b16 %v219
    %v953 = vunpack.c.h.b16 %v219
    %v954 = vunpack.c.l.b16 %v220
    %v955 = vunpack.c.h.b16 %v220
    %v956 = vunpack.c.l.b16 %v221
    %v957 = vunpack.c.h.b16 %v221
    %v958 = vunpack.c.l.b16 %v222
    %v959 = vunpack.c.h.b16 %v222
    %v960 = vunpack.c.l.b16 %v223
    %v961 = vunpack.c.h.b16 %v223
    %v962 = vunpack.c.l.b16 %v224
    %v963 = vunpack.c.h.b16 %v224
    %v964 = vunpack.c.l.b16 %v225
    %v965 = vunpack.c.h.b16 %v225
    %v966 = vunpack.c.l.b16 %v226
    %v967 = vunpack.c.h.b16 %v226
    %v968 = vunpack.c.l.b16 %v227
    %v969 = vunpack.c.h.b16 %v227
    %v970 = vunpack.c.l.b16 %v228
    %v971 = vunpack.c.h.b16 %v228
    %v972 = vunpack.c.l.b16 %v229
    %v973 = vunpack.c.h.b16 %v229
    %v974 = vunpack.c.l.b16 %v230
    %v975 = vunpack.c.h.b16 %v230
    %v976 = vunpack.c.l.b16 %v231
    %v977 = vunpack.c.h.b16 %v231
    %v978 = vunpack.c.l.b16 %v232
    %v979 = vunpack.c.h.b16 %v232
    %v980 = vunpack.c.l.b16 %v233
    %v981 = vunpack.c.h.b16 %v233
    %v982 = vunpack.c.l.b16 %v234
    %v983 = vunpack.c.h.b16 %v234
    %v984 = vunpack.c.l.b16 %v235
    %v985 = vunpack.c.h.b16 %v235
    %v986 = vunpack.c.l.b16 %v236
    %v987 = vunpack.c.h.b16 %v236
    %v988 = vunpack.c.l.b16 %v237
    %v989 = vunpack.c.h.b16 %v237
    %v990 = vunpack.c.l.b16 %v238
    %v991 = vunpack.c.h.b16 %v238
    %v992 = vunpack.c.l.b16 %v239
    %v993 = vunpack.c.h.b16 %v239
    %v994 = vunpack.c.l.b16 %v240
    %v995 = vunpack.c.h.b16 %v240
    %v996 = vunpack.c.l.b16 %v241
    %v997 = vunpack.c.h.b16 %v241
    %v998 = vunpack.c.l.b16 %v242
    %v999 = vunpack.c.h.b16 %v242
    %v1000 = vunpack.c.l.b16 %v243
    %v1001 = vunpack.c.h.b16 %v243
    %v1002 = vunpack.c.l.b16 %v244
    %v1003 = vunpack.c.h.b16 %v244
    %v1004 = vunpack.c.l.b16 %v245
    %v1005 = vunpack.c.h.b16 %v245
    %v1006 = vunpack.c.l.b16 %v246
    %v1007 = vunpack.c.h.b16 %v246
    %v1008 = vunpack.c.l.b16 %v247
    %v1009 = vunpack.c.h.b16 %v247
    %v1010 = vunpack.c.l.b16 %v248
    %v1011 = vunpack.c.h.b16 %v248
    %v1012 = vunpack.c.l.b16 %v249
    %v1013 = vunpack.c.h.b16 %v249
    %v1014 = vunpack.c.l.b16 %v250
    %v1015 = vunpack.c.h.b16 %v250
    %v1016 = vunpack.c.l.b16 %v251
    %v1017 = vunpack.c.h.b16 %v251
    %v1018 = vunpack.c.l.b16 %v252
    %v1019 = vunpack.c.h.b16 %v252
    %v1020 = vunpack.c.l.b16 %v253
    %v1021 = vunpack.c.h.b16 %v253
    %v1022 = vunpack.c.l.b16 %v254
    %v1023 = vunpack.c.h.b16 %v254
    %v1024 = vunpack.c.l.b16 %v255
    %v1025 = vunpack.c.h.b16 %v255
    %v1026 = vunpack.c.l.b16 %v256
    %v1027 = vunpack.c.h.b16 %v256
    %v1028 = vunpack.c.l.b16 %v257
    %v1029 = vunpack.c.h.b16 %v257
    %v1030 = vunpack.c.l.b16 %v258
    %v1031 = vunpack.c.h.b16 %v258
    %v1032 = vunpack.c.l.b16 %v259
    %v1033 = vunpack.c.h.b16 %v259
    %v1034 = vunpack.c.l.b16 %v260
    %v1035 = vunpack.c.h.b16 %v260
    %v1036 = vunpack.c.l.b16 %v261
    %v1037 = vunpack.c.h.b16 %v261
    %v1038 = vunpack.c.l.b16 %v262
    %v1039 = vunpack.c.h.b16 %v262
    %v1040 = vunpack.c.l.b16 %v263
    %v1041 = vunpack.c.h.b16 %v263
    %v1042 = vunpack.c.l.b16 %v264
    %v1043 = vunpack.c.h.b16 %v264
    %v1044 = vunpack.c.l.b16 %v265
    %v1045 = vunpack.c.h.b16 %v265
    %v1046 = vunpack.c.l.b16 %v266
    %v1047 = vunpack.c.h.b16 %v266
    %v1048 = vunpack.c.l.b16 %v267
    %v1049 = vunpack.c.h.b16 %v267
    %v1050 = vunpack.c.l.b16 %v268
    %v1051 = vunpack.c.h.b16 %v268
    %v1052 = vunpack.c.l.b16 %v269
    %v1053 = vunpack.c.h.b16 %v269
    %v1054 = vunpack.c.l.b16 %v270
    %v1055 = vunpack.c.h.b16 %v270
    %v1056 = vunpack.c.l.b16 %v271
    %v1057 = vunpack.c.h.b16 %v271
    %v1058 = vunpack.c.l.b16 %v272
    %v1059 = vunpack.c.h.b16 %v272
    %v1060 = vunpack.c.l.b16 %v273
    %v1061 = vunpack.c.h.b16 %v273
    %v1062 = vunpack.c.l.b16 %v274
    %v1063 = vunpack.c.h.b16 %v274
    %v1064 = vunpack.c.l.b16 %v275
    %v1065 = vunpack.c.h.b16 %v275
    %v1066 = vunpack.c.l.b16 %v276
    %v1067 = vunpack.c.h.b16 %v276
    %v1068 = vunpack.c.l.b16 %v277
    %v1069 = vunpack.c.h.b16 %v277
    %v1070 = vunpack.c.l.b16 %v278
    %v1071 = vunpack.c.h.b16 %v278
    %v1072 = vunpack.c.l.b16 %v279
    %v1073 = vunpack.c.h.b16 %v279
    %v1074 = vunpack.c.l.b16 %v280
    %v1075 = vunpack.c.h.b16 %v280
    %v1076 = vunpack.c.l.b16 %v281
    %v1077 = vunpack.c.h.b16 %v281
    %v1078 = vunpack.c.l.b16 %v282
    %v1079 = vunpack.c.h.b16 %v282
    %v1080 = vunpack.c.l.b16 %v283
    %v1081 = vunpack.c.h.b16 %v283
    %v1082 = vunpack.c.l.b16 %v284
    %v1083 = vunpack.c.h.b16 %v284
    %v1084 = vunpack.c.l.b16 %v285
    %v1085 = vunpack.c.h.b16 %v285
    %v1086 = vunpack.c.l.b16 %v286
    %v1087 = vunpack.c.h.b16 %v286
    %v1088 = vunpack.c.l.b16 %v287
    %v1089 = vunpack.c.h.b16 %v287
    %v1090 = vunpack.c.l.b16 %v288
    %v1091 = vunpack.c.h.b16 %v288
    %v1092 = vunpack.c.l.b16 %v289
    %v1093 = vunpack.c.h.b16 %v289
    %v1094 = vunpack.c.l.b16 %v290
    %v1095 = vunpack.c.h.b16 %v290
    %v1096 = vunpack.c.l.b16 %v291
    %v1097 = vunpack.c.h.b16 %v291
    %v1098 = vunpack.c.l.b16 %v292
    %v1099 = vunpack.c.h.b16 %v292
    %v1100 = vunpack.c.l.b16 %v293
    %v1101 = vunpack.c.h.b16 %v293
    %v1102 = vunpack.c.l.b16 %v294
    %v1103 = vunpack.c.h.b16 %v294
    %v1104 = vunpack.c.l.b16 %v295
    %v1105 = vunpack.c.h.b16 %v295
    %v1106 = vunpack.c.l.b16 %v296
    %v1107 = vunpack.c.h.b16 %v296
    %v1108 = vunpack.c.l.b16 %v297
    %v1109 = vunpack.c.h.b16 %v297
    %v1110 = vunpack.c.l.b16 %v298
    %v1111 = vunpack.c.h.b16 %v298
    %v1112 = vunpack.c.l.b16 %v299
    %v1113 = vunpack.c.h.b16 %v299
    %v1114 = vunpack.c.l.b16 %v300
    %v1115 = vunpack.c.h.b16 %v300
    %v1116 = vunpack.c.l.b16 %v301
    %v1117 = vunpack.c.h.b16 %v301
    %v1118 = vunpack.c.l.b16 %v302
    %v1119 = vunpack.c.h.b16 %v302
    %v1120 = vunpack.c.l.b16 %v303
    %v1121 = vunpack.c.h.b16 %v303
    %v1122 = vunpack.c.l.b16 %v304
    %v1123 = vunpack.c.h.b16 %v304
    %v1124 = vunpack.c.l.b16 %v305
    %v1125 = vunpack.c.h.b16 %v305
    %v1126 = vunpack.c.l.b16 %v306
    %v1127 = vunpack.c.h.b16 %v306
    %v1128 = vunpack.c.l.b16 %v307
    %v1129 = vunpack.c.h.b16 %v307
    %v1130 = vunpack.c.l.b16 %v308
    %v1131 = vunpack.c.h.b16 %v308
    %v1132 = vunpack.c.l.b16 %v309
    %v1133 = vunpack.c.h.b16 %v309
    %v1134 = vpack.c.b16 %v630, %v622
    %v1135 = vpack.c.b16 %v631, %v623
    %v1136 = vpack.c.b16 %v632, %v624
    %v1137 = vpack.c.b16 %v633, %v625
    %v1138 = vpack.c.b16 %v634, %v626
    %v1139 = vpack.c.b16 %v635, %v627
    %v1140 = vpack.c.b16 %v636, %v628
    %v1141 = vpack.c.b16 %v637, %v629
    %v1142 = vpack.c.b16 %v646, %v638
    %v1143 = vpack.c.b16 %v647, %v639
    %v1144 = vpack.c.b16 %v648, %v640
    %v1145 = vpack.c.b16 %v649, %v641
    %v1146 = vpack.c.b16 %v650, %v642
    %v1147 = vpack.c.b16 %v651, %v643
    %v1148 = vpack.c.b16 %v652, %v644
    %v1149 = vpack.c.b16 %v653, %v645
    %v1150 = vpack.c.b16 %v662, %v654
    %v1151 = vpack.c.b16 %v663, %v655
    %v1152 = vpack.c.b16 %v664, %v656
    %v1153 = vpack.c.b16 %v665, %v657
    %v1154 = vpack.c.b16 %v666, %v658
    %v1155 = vpack.c.b16 %v667, %v659
    %v1156 = vpack.c.b16 %v668, %v660
    %v1157 = vpack.c.b16 %v669, %v661
    %v1158 = vpack.c.b16 %v678, %v670
    %v1159 = vpack.c.b16 %v679, %v671
    %v1160 = vpack.c.b16 %v680, %v672
    %v1161 = vpack.c.b16 %v681, %v673
    %v1162 = vpack.c.b16 %v682, %v674
    %v1163 = vpack.c.b16 %v683, %v675
    %v1164 = vpack.c.b16 %v684, %v676
    %v1165 = vpack.c.b16 %v685, %v677
    %v1166 = vpack.c.b16 %v694, %v686
    %v1167 = vpack.c.b16 %v695, %v687
    %v1168 = vpack.c.b16 %v696, %v688
    %v1169 = vpack.c.b16 %v697, %v689
    %v1170 = vpack.c.b16 %v698, %v690
    %v1171 = vpack.c.b16 %v699, %v691
    %v1172 = vpack.c.b16 %v700, %v692
    %v1173 = vpack.c.b16 %v701, %v693
    %v1174 = vpack.c.b16 %v710, %v702
    %v1175 = vpack.c.b16 %v711, %v703
    %v1176 = vpack.c.b16 %v712, %v704
    %v1177 = vpack.c.b16 %v713, %v705
    %v1178 = vpack.c.b16 %v714, %v706
    %v1179 = vpack.c.b16 %v715, %v707
    %v1180 = vpack.c.b16 %v716, %v708
    %v1181 = vpack.c.b16 %v717, %v709
    %v1182 = vpack.c.b16 %v726, %v718
    %v1183 = vpack.c.b16 %v727, %v719
    %v1184 = vpack.c.b16 %v728, %v720
    %v1185 = vpack.c.b16 %v729, %v721
    %v1186 = vpack.c.b16 %v730, %v722
    %v1187 = vpack.c.b16 %v731, %v723
    %v1188 = vpack.c.b16 %v732, %v724
    %v1189 = vpack.c.b16 %v733, %v725
    %v1190 = vpack.c.b16 %v742, %v734
    %v1191 = vpack.c.b16 %v743, %v735
    %v1192 = vpack.c.b16 %v744, %v736
    %v1193 = vpack.c.b16 %v745, %v737
    %v1194 = vpack.c.b16 %v746, %v738
    %v1195 = vpack.c.b16 %v747, %v739
    %v1196 = vpack.c.b16 %v748, %v740
    %v1197 = vpack.c.b16 %v749, %v741
    %v1198 = vpack.c.b16 %v758, %v750
    %v1199 = vpack.c.b16 %v759, %v751
    %v1200 = vpack.c.b16 %v760, %v752
    %v1201 = vpack.c.b16 %v761, %v753
    %v1202 = vpack.c.b16 %v762, %v754
    %v1203 = vpack.c.b16 %v763, %v755
    %v1204 = vpack.c.b16 %v764, %v756
    %v1205 = vpack.c.b16 %v765, %v757
    %v1206 = vpack.c.b16 %v774, %v766
    %v1207 = vpack.c.b16 %v775, %v767
    %v1208 = vpack.c.b16 %v776, %v768
    %v1209 = vpack.c.b16 %v777, %v769
    %v1210 = vpack.c.b16 %v778, %v770
    %v1211 = vpack.c.b16 %v779, %v771
    %v1212 = vpack.c.b16 %v780, %v772
    %v1213 = vpack.c.b16 %v781, %v773
    %v1214 = vpack.c.b16 %v790, %v782
    %v1215 = vpack.c.b16 %v791, %v783
    %v1216 = vpack.c.b16 %v792, %v784
    %v1217 = vpack.c.b16 %v793, %v785
    %v1218 = vpack.c.b16 %v794, %v786
    %v1219 = vpack.c.b16 %v795, %v787
    %v1220 = vpack.c.b16 %v796, %v788
    %v1221 = vpack.c.b16 %v797, %v789
    %v1222 = vpack.c.b16 %v806, %v798
    %v1223 = vpack.c.b16 %v807, %v799
    %v1224 = vpack.c.b16 %v808, %v800
    %v1225 = vpack.c.b16 %v809, %v801
    %v1226 = vpack.c.b16 %v810, %v802
    %v1227 = vpack.c.b16 %v811, %v803
    %v1228 = vpack.c.b16 %v812, %v804
    %v1229 = vpack.c.b16 %v813, %v805
    %v1230 = vpack.c.b16 %v822, %v814
    %v1231 = vpack.c.b16 %v823, %v815
    %v1232 = vpack.c.b16 %v824, %v816
    %v1233 = vpack.c.b16 %v825, %v817
    %v1234 = vpack.c.b16 %v826, %v818
    %v1235 = vpack.c.b16 %v827, %v819
    %v1236 = vpack.c.b16 %v828, %v820
    %v1237 = vpack.c.b16 %v829, %v821
    %v1238 = vpack.c.b16 %v838, %v830
    %v1239 = vpack.c.b16 %v839, %v831
    %v1240 = vpack.c.b16 %v840, %v832
    %v1241 = vpack.c.b16 %v841, %v833
    %v1242 = vpack.c.b16 %v842, %v834
    %v1243 = vpack.c.b16 %v843, %v835
    %v1244 = vpack.c.b16 %v844, %v836
    %v1245 = vpack.c.b16 %v845, %v837
    %v1246 = vpack.c.b16 %v854, %v846
    %v1247 = vpack.c.b16 %v855, %v847
    %v1248 = vpack.c.b16 %v856, %v848
    %v1249 = vpack.c.b16 %v857, %v849
    %v1250 = vpack.c.b16 %v858, %v850
    %v1251 = vpack.c.b16 %v859, %v851
    %v1252 = vpack.c.b16 %v860, %v852
    %v1253 = vpack.c.b16 %v861, %v853
    %v1254 = vpack.c.b16 %v870, %v862
    %v1255 = vpack.c.b16 %v871, %v863
    %v1256 = vpack.c.b16 %v872, %v864
    %v1257 = vpack.c.b16 %v873, %v865
    %v1258 = vpack.c.b16 %v874, %v866
    %v1259 = vpack.c.b16 %v875, %v867
    %v1260 = vpack.c.b16 %v876, %v868
    %v1261 = vpack.c.b16 %v877, %v869
    %v1262 = vpack.c.b16 %v886, %v878
    %v1263 = vpack.c.b16 %v887, %v879
    %v1264 = vpack.c.b16 %v888, %v880
    %v1265 = vpack.c.b16 %v889, %v881
    %v1266 = vpack.c.b16 %v890, %v882
    %v1267 = vpack.c.b16 %v891, %v883
    %v1268 = vpack.c.b16 %v892, %v884
    %v1269 = vpack.c.b16 %v893, %v885
    %v1270 = vpack.c.b16 %v902, %v894
    %v1271 = vpack.c.b16 %v903, %v895
    %v1272 = vpack.c.b16 %v904, %v896
    %v1273 = vpack.c.b16 %v905, %v897
    %v1274 = vpack.c.b16 %v906, %v898
    %v1275 = vpack.c.b16 %v907, %v899
    %v1276 = vpack.c.b16 %v908, %v900
    %v1277 = vpack.c.b16 %v909, %v901
    %v1278 = vpack.c.b16 %v918, %v910
    %v1279 = vpack.c.b16 %v919, %v911
    %v1280 = vpack.c.b16 %v920, %v912
    %v1281 = vpack.c.b16 %v921, %v913
    %v1282 = vpack.c.b16 %v922, %v914
    %v1283 = vpack.c.b16 %v923, %v915
    %v1284 = vpack.c.b16 %v924, %v916
    %v1285 = vpack.c.b16 %v925, %v917
    %v1286 = vpack.c.b16 %v934, %v926
    %v1287 = vpack.c.b16 %v935, %v927
    %v1288 = vpack.c.b16 %v936, %v928
    %v1289 = vpack.c.b16 %v937, %v929
    %v1290 = vpack.c.b16 %v938, %v930
    %v1291 = vpack.c.b16 %v939, %v931
    %v1292 = vpack.c.b16 %v940, %v932
    %v1293 = vpack.c.b16 %v941, %v933
    %v1294 = vpack.c.b16 %v950, %v942
    %v1295 = vpack.c.b16 %v951, %v943
    %v1296 = vpack.c.b16 %v952, %v944
    %v1297 = vpack.c.b16 %v953, %v945
    %v1298 = vpack.c.b16 %v954, %v946
    %v1299 = vpack.c.b16 %v955, %v947
    %v1300 = vpack.c.b16 %v956, %v948
    %v1301 = vpack.c.b16 %v957, %v949
    %v1302 = vpack.c.b16 %v966, %v958
    %v1303 = vpack.c.b16 %v967, %v959
    %v1304 = vpack.c.b16 %v968, %v960
    %v1305 = vpack.c.b16 %v969, %v961
    %v1306 = vpack.c.b16 %v970, %v962
    %v1307 = vpack.c.b16 %v971, %v963
    %v1308 = vpack.c.b16 %v972, %v964
    %v1309 = vpack.c.b16 %v973, %v965
    %v1310 = vpack.c.b16 %v982, %v974
    %v1311 = vpack.c.b16 %v983, %v975
    %v1312 = vpack.c.b16 %v984, %v976
    %v1313 = vpack.c.b16 %v985, %v977
    %v1314 = vpack.c.b16 %v986, %v978
    %v1315 = vpack.c.b16 %v987, %v979
    %v1316 = vpack.c.b16 %v988, %v980
    %v1317 = vpack.c.b16 %v989, %v981
    %v1318 = vpack.c.b16 %v998, %v990
    %v1319 = vpack.c.b16 %v999, %v991
    %v1320 = vpack.c.b16 %v1000, %v992
    %v1321 = vpack.c.b16 %v1001, %v993
    %v1322 = vpack.c.b16 %v1002, %v994
    %v1323 = vpack.c.b16 %v1003, %v995
    %v1324 = vpack.c.b16 %v1004, %v996
    %v1325 = vpack.c.b16 %v1005, %v997
    %v1326 = vpack.c.b16 %v1014, %v1006
    %v1327 = vpack.c.b16 %v1015, %v1007
    %v1328 = vpack.c.b16 %v1016, %v1008
    %v1329 = vpack.c.b16 %v1017, %v1009
    %v1330 = vpack.c.b16 %v1018, %v1010
    %v1331 = vpack.c.b16 %v1019, %v1011
    %v1332 = vpack.c.b16 %v1020, %v1012
    %v1333 = vpack.c.b16 %v1021, %v1013
    %v1334 = vpack.c.b16 %v1030, %v1022
    %v1335 = vpack.c.b16 %v1031, %v1023
    %v1336 = vpack.c.b16 %v1032, %v1024
    %v1337 = vpack.c.b16 %v1033, %v1025
    %v1338 = vpack.c.b16 %v1034, %v1026
    %v1339 = vpack.c.b16 %v1035, %v1027
    %v1340 = vpack.c.b16 %v1036, %v1028
    %v1341 = vpack.c.b16 %v1037, %v1029
    %v1342 = vpack.c.b16 %v1046, %v1038
    %v1343 = vpack.c.b16 %v1047, %v1039
    %v1344 = vpack.c.b16 %v1048, %v1040
    %v1345 = vpack.c.b16 %v1049, %v1041
    %v1346 = vpack.c.b16 %v1050, %v1042
    %v1347 = vpack.c.b16 %v1051, %v1043
    %v1348 = vpack.c.b16 %v1052, %v1044
    %v1349 = vpack.c.b16 %v1053, %v1045
    %v1350 = vpack.c.b16 %v1062, %v1054
    %v1351 = vpack.c.b16 %v1063, %v1055
    %v1352 = vpack.c.b16 %v1064, %v1056
    %v1353 = vpack.c.b16 %v1065, %v1057
    %v1354 = vpack.c.b16 %v1066, %v1058
    %v1355 = vpack.c.b16 %v1067, %v1059
    %v1356 = vpack.c.b16 %v1068, %v1060
    %v1357 = vpack.c.b16 %v1069, %v1061
    %v1358 = vpack.c.b16 %v1078, %v1070
    %v1359 = vpack.c.b16 %v1079, %v1071
    %v1360 = vpack.c.b16 %v1080, %v1072
    %v1361 = vpack.c.b16 %v1081, %v1073
    %v1362 = vpack.c.b16 %v1082, %v1074
    %v1363 = vpack.c.b16 %v1083, %v1075
    %v1364 = vpack.c.b16 %v1084, %v1076
    %v1365 = vpack.c.b16 %v1085, %v1077
    %v1366 = vpack.c.b16 %v1094, %v1086
    %v1367 = vpack.c.b16 %v1095, %v1087
    %v1368 = vpack.c.b16 %v1096, %v1088
    %v1369 = vpack.c.b16 %v1097, %v1089
    %v1370 = vpack.c.b16 %v1098, %v1090
    %v1371 = vpack.c.b16 %v1099, %v1091
    %v1372 = vpack.c.b16 %v1100, %v1092
    %v1373 = vpack.c.b16 %v1101, %v1093
    %v1374 = vpack.c.b16 %v1110, %v1102
    %v1375 = vpack.c.b16 %v1111, %v1103
    %v1376 = vpack.c.b16 %v1112, %v1104
    %v1377 = vpack.c.b16 %v1113, %v1105
    %v1378 = vpack.c.b16 %v1114, %v1106
    %v1379 = vpack.c.b16 %v1115, %v1107
    %v1380 = vpack.c.b16 %v1116, %v1108
    %v1381 = vpack.c.b16 %v1117, %v1109
    %v1382 = vpack.c.b16 %v1126, %v1118
    %v1383 = vpack.c.b16 %v1127, %v1119
    %v1384 = vpack.c.b16 %v1128, %v1120
    %v1385 = vpack.c.b16 %v1129, %v1121
    %v1386 = vpack.c.b16 %v1130, %v1122
    %v1387 = vpack.c.b16 %v1131, %v1123
    %v1388 = vpack.c.b16 %v1132, %v1124
    %v1389 = vpack.c.b16 %v1133, %v1125
    %1646 = vmatprep.subr.bf16.mxu0 %v1135
    %1647 = vmatpush1.bf16.msra.mxu0 %v1134
    %1648 = vmatprep.subr.bf16.mxu0 %v1143
    %1649 = vmatpush1.bf16.msra.mxu0 %v1142
    %1650 = vmatprep.subr.bf16.mxu0 %v1151
    %1651 = vmatpush1.bf16.msra.mxu0 %v1150
    %1652 = vmatprep.subr.bf16.mxu0 %v1159
    %1653 = vmatpush1.bf16.msra.mxu0 %v1158
    %1654 = vmatprep.subr.bf16.mxu0 %v1167
    %1655 = vmatpush1.bf16.msra.mxu0 %v1166
    %1656 = vmatprep.subr.bf16.mxu0 %v1175
    %1657 = vmatpush1.bf16.msra.mxu0 %v1174
    %1658 = vmatprep.subr.bf16.mxu0 %v1183
    %1659 = vmatpush1.bf16.msra.mxu0 %v1182
    %1660 = vmatprep.subr.bf16.mxu0 %v1191
    %1661 = vmatpush1.bf16.msra.mxu0 %v1190
    %1662 = vmatprep.subr.bf16.mxu0 %v1199
    %1663 = vmatpush1.bf16.msra.mxu0 %v1198
    %1664 = vmatprep.subr.bf16.mxu0 %v1207
    %1665 = vmatpush1.bf16.msra.mxu0 %v1206
    %1666 = vmatprep.subr.bf16.mxu0 %v1215
    %1667 = vmatpush1.bf16.msra.mxu0 %v1214
    %1668 = vmatprep.subr.bf16.mxu0 %v1223
    %1669 = vmatpush1.bf16.msra.mxu0 %v1222
    %1670 = vmatprep.subr.bf16.mxu0 %v1231
    %1671 = vmatpush1.bf16.msra.mxu0 %v1230
    %1672 = vmatprep.subr.bf16.mxu0 %v1239
    %1673 = vmatpush1.bf16.msra.mxu0 %v1238
    %1674 = vmatprep.subr.bf16.mxu0 %v1247
    %1675 = vmatpush1.bf16.msra.mxu0 %v1246
    %1676 = vmatprep.subr.bf16.mxu0 %v1255
    %1677 = vmatpush1.bf16.msra.mxu0 %v1254
    %1678 = vmatprep.mubr.bf16.mxu0 %v359
    %1679 = vmatmul.mubr.bf16.gmra.mrb[0].mxu0 %v358
    %v1680 = vpop.f32.mrb[0].mxu0
    %v1681 = vadd.f32 %v315, %v1680
    %v1682 = vpop.f32.mrb[0].mxu0
    %v1683 = vadd.f32 %v319, %v1682
    %v1684 = vpop.f32.mrb[0].mxu0
    %v1685 = vpop.f32.mrb[0].mxu0
    %1686 = vdwg.mxu0
    %1687 = vmatprep.subr.bf16.mxu0 %v1263
    %1688 = vmatpush1.bf16.msra.mxu0 %v1262
    %1689 = vmatprep.subr.bf16.mxu0 %v1271
    %1690 = vmatpush1.bf16.msra.mxu0 %v1270
    %1691 = vmatprep.subr.bf16.mxu0 %v1279
    %1692 = vmatpush1.bf16.msra.mxu0 %v1278
    %1693 = vmatprep.subr.bf16.mxu0 %v1287
    %1694 = vmatpush1.bf16.msra.mxu0 %v1286
    %1695 = vmatprep.subr.bf16.mxu0 %v1295
    %1696 = vmatpush1.bf16.msra.mxu0 %v1294
    %1697 = vmatprep.subr.bf16.mxu0 %v1303
    %1698 = vmatpush1.bf16.msra.mxu0 %v1302
    %1699 = vmatprep.subr.bf16.mxu0 %v1311
    %1700 = vmatpush1.bf16.msra.mxu0 %v1310
    %1701 = vmatprep.subr.bf16.mxu0 %v1319
    %1702 = vmatpush1.bf16.msra.mxu0 %v1318
    %1703 = vmatprep.subr.bf16.mxu0 %v1327
    %1704 = vmatpush1.bf16.msra.mxu0 %v1326
    %1705 = vmatprep.subr.bf16.mxu0 %v1335
    %1706 = vmatpush1.bf16.msra.mxu0 %v1334
    %1707 = vmatprep.subr.bf16.mxu0 %v1343
    %1708 = vmatpush1.bf16.msra.mxu0 %v1342
    %1709 = vmatprep.subr.bf16.mxu0 %v1351
    %1710 = vmatpush1.bf16.msra.mxu0 %v1350
    %1711 = vmatprep.subr.bf16.mxu0 %v1359
    %1712 = vmatpush1.bf16.msra.mxu0 %v1358
    %1713 = vmatprep.subr.bf16.mxu0 %v1367
    %1714 = vmatpush1.bf16.msra.mxu0 %v1366
    %1715 = vmatprep.subr.bf16.mxu0 %v1375
    %1716 = vmatpush1.bf16.msra.mxu0 %v1374
    %1717 = vmatprep.subr.bf16.mxu0 %v1383
    %1718 = vmatpush1.bf16.msra.mxu0 %v1382
    %1719 = vmatprep.mubr.bf16.mxu0 %v361
    %1720 = vmatmul.mubr.bf16.gmra.mrb[0].mxu0 %v360
    %v1721 = vpop.f32.mrb[0].mxu0
    %v1722 = vadd.f32 %v1681, %v1721
    %v1723 = vpop.f32.mrb[0].mxu0
    %v1724 = vadd.f32 %v1683, %v1723
    %v1725 = vpop.f32.mrb[0].mxu0
    %v1726 = vpop.f32.mrb[0].mxu0
    %1727 = vdwg.mxu0
    %1728 = vmatprep.subr.bf16.mxu0 %v1137
    %1729 = vmatpush1.bf16.msra.mxu0 %v1136
    %1730 = vmatprep.subr.bf16.mxu0 %v1145
    %1731 = vmatpush1.bf16.msra.mxu0 %v1144
    %1732 = vmatprep.subr.bf16.mxu0 %v1153
    %1733 = vmatpush1.bf16.msra.mxu0 %v1152
    %1734 = vmatprep.subr.bf16.mxu0 %v1161
    %1735 = vmatpush1.bf16.msra.mxu0 %v1160
    %1736 = vmatprep.subr.bf16.mxu0 %v1169
    %1737 = vmatpush1.bf16.msra.mxu0 %v1168
    %1738 = vmatprep.subr.bf16.mxu0 %v1177
    %1739 = vmatpush1.bf16.msra.mxu0 %v1176
    %1740 = vmatprep.subr.bf16.mxu0 %v1185
    %1741 = vmatpush1.bf16.msra.mxu0 %v1184
    %1742 = vmatprep.subr.bf16.mxu0 %v1193
    %1743 = vmatpush1.bf16.msra.mxu0 %v1192
    %1744 = vmatprep.subr.bf16.mxu0 %v1201
    %1745 = vmatpush1.bf16.msra.mxu0 %v1200
    %1746 = vmatprep.subr.bf16.mxu0 %v1209
    %1747 = vmatpush1.bf16.msra.mxu0 %v1208
    %1748 = vmatprep.subr.bf16.mxu0 %v1217
    %1749 = vmatpush1.bf16.msra.mxu0 %v1216
    %1750 = vmatprep.subr.bf16.mxu0 %v1225
    %1751 = vmatpush1.bf16.msra.mxu0 %v1224
    %1752 = vmatprep.subr.bf16.mxu0 %v1233
    %1753 = vmatpush1.bf16.msra.mxu0 %v1232
    %1754 = vmatprep.subr.bf16.mxu0 %v1241
    %1755 = vmatpush1.bf16.msra.mxu0 %v1240
    %1756 = vmatprep.subr.bf16.mxu0 %v1249
    %1757 = vmatpush1.bf16.msra.mxu0 %v1248
    %1758 = vmatprep.subr.bf16.mxu0 %v1257
    %1759 = vmatpush1.bf16.msra.mxu0 %v1256
    %1760 = vmatprep.mubr.bf16.mxu0 %v359
    %1761 = vmatmul.mubr.bf16.gmra.mrb[0].mxu0 %v358
    %v1762 = vpop.f32.mrb[0].mxu0
    %v1763 = vadd.f32 %v323, %v1762
    %v1764 = vpop.f32.mrb[0].mxu0
    %v1765 = vadd.f32 %v327, %v1764
    %v1766 = vpop.f32.mrb[0].mxu0
    %v1767 = vpop.f32.mrb[0].mxu0
    %1768 = vdwg.mxu0
    %1769 = vmatprep.subr.bf16.mxu0 %v1265
    %1770 = vmatpush1.bf16.msra.mxu0 %v1264
    %1771 = vmatprep.subr.bf16.mxu0 %v1273
    %1772 = vmatpush1.bf16.msra.mxu0 %v1272
    %1773 = vmatprep.subr.bf16.mxu0 %v1281
    %1774 = vmatpush1.bf16.msra.mxu0 %v1280
    %1775 = vmatprep.subr.bf16.mxu0 %v1289
    %1776 = vmatpush1.bf16.msra.mxu0 %v1288
    %1777 = vmatprep.subr.bf16.mxu0 %v1297
    %1778 = vmatpush1.bf16.msra.mxu0 %v1296
    %1779 = vmatprep.subr.bf16.mxu0 %v1305
    %1780 = vmatpush1.bf16.msra.mxu0 %v1304
    %1781 = vmatprep.subr.bf16.mxu0 %v1313
    %1782 = vmatpush1.bf16.msra.mxu0 %v1312
    %1783 = vmatprep.subr.bf16.mxu0 %v1321
    %1784 = vmatpush1.bf16.msra.mxu0 %v1320
    %1785 = vmatprep.subr.bf16.mxu0 %v1329
    %1786 = vmatpush1.bf16.msra.mxu0 %v1328
    %1787 = vmatprep.subr.bf16.mxu0 %v1337
    %1788 = vmatpush1.bf16.msra.mxu0 %v1336
    %1789 = vmatprep.subr.bf16.mxu0 %v1345
    %1790 = vmatpush1.bf16.msra.mxu0 %v1344
    %1791 = vmatprep.subr.bf16.mxu0 %v1353
    %1792 = vmatpush1.bf16.msra.mxu0 %v1352
    %1793 = vmatprep.subr.bf16.mxu0 %v1361
    %1794 = vmatpush1.bf16.msra.mxu0 %v1360
    %1795 = vmatprep.subr.bf16.mxu0 %v1369
    %1796 = vmatpush1.bf16.msra.mxu0 %v1368
    %1797 = vmatprep.subr.bf16.mxu0 %v1377
    %1798 = vmatpush1.bf16.msra.mxu0 %v1376
    %1799 = vmatprep.subr.bf16.mxu0 %v1385
    %1800 = vmatpush1.bf16.msra.mxu0 %v1384
    %1801 = vmatprep.mubr.bf16.mxu0 %v361
    %1802 = vmatmul.mubr.bf16.gmra.mrb[0].mxu0 %v360
    %v1803 = vpop.f32.mrb[0].mxu0
    %v1804 = vadd.f32 %v1763, %v1803
    %v1805 = vpop.f32.mrb[0].mxu0
    %v1806 = vadd.f32 %v1765, %v1805
    %v1807 = vpop.f32.mrb[0].mxu0
    %v1808 = vpop.f32.mrb[0].mxu0
    %1809 = vdwg.mxu0
    %1810 = vmatprep.subr.bf16.mxu0 %v1139
    %1811 = vmatpush1.bf16.msra.mxu0 %v1138
    %1812 = vmatprep.subr.bf16.mxu0 %v1147
    %1813 = vmatpush1.bf16.msra.mxu0 %v1146
    %1814 = vmatprep.subr.bf16.mxu0 %v1155
    %1815 = vmatpush1.bf16.msra.mxu0 %v1154
    %1816 = vmatprep.subr.bf16.mxu0 %v1163
    %1817 = vmatpush1.bf16.msra.mxu0 %v1162
    %1818 = vmatprep.subr.bf16.mxu0 %v1171
    %1819 = vmatpush1.bf16.msra.mxu0 %v1170
    %1820 = vmatprep.subr.bf16.mxu0 %v1179
    %1821 = vmatpush1.bf16.msra.mxu0 %v1178
    %1822 = vmatprep.subr.bf16.mxu0 %v1187
    %1823 = vmatpush1.bf16.msra.mxu0 %v1186
    %1824 = vmatprep.subr.bf16.mxu0 %v1195
    %1825 = vmatpush1.bf16.msra.mxu0 %v1194
    %1826 = vmatprep.subr.bf16.mxu0 %v1203
    %1827 = vmatpush1.bf16.msra.mxu0 %v1202
    %1828 = vmatprep.subr.bf16.mxu0 %v1211
    %1829 = vmatpush1.bf16.msra.mxu0 %v1210
    %1830 = vmatprep.subr.bf16.mxu0 %v1219
    %1831 = vmatpush1.bf16.msra.mxu0 %v1218
    %1832 = vmatprep.subr.bf16.mxu0 %v1227
    %1833 = vmatpush1.bf16.msra.mxu0 %v1226
    %1834 = vmatprep.subr.bf16.mxu0 %v1235
    %1835 = vmatpush1.bf16.msra.mxu0 %v1234
    %1836 = vmatprep.subr.bf16.mxu0 %v1243
    %1837 = vmatpush1.bf16.msra.mxu0 %v1242
    %1838 = vmatprep.subr.bf16.mxu0 %v1251
    %1839 = vmatpush1.bf16.msra.mxu0 %v1250
    %1840 = vmatprep.subr.bf16.mxu0 %v1259
    %1841 = vmatpush1.bf16.msra.mxu0 %v1258
    %1842 = vmatprep.mubr.bf16.mxu0 %v359
    %1843 = vmatmul.mubr.bf16.gmra.mrb[0].mxu0 %v358
    %v1844 = vpop.f32.mrb[0].mxu0
    %v1845 = vadd.f32 %v331, %v1844
    %v1846 = vpop.f32.mrb[0].mxu0
    %v1847 = vadd.f32 %v335, %v1846
    %v1848 = vpop.f32.mrb[0].mxu0
    %v1849 = vpop.f32.mrb[0].mxu0
    %1850 = vdwg.mxu0
    %1851 = vmatprep.subr.bf16.mxu0 %v1267
    %1852 = vmatpush1.bf16.msra.mxu0 %v1266
    %1853 = vmatprep.subr.bf16.mxu0 %v1275
    %1854 = vmatpush1.bf16.msra.mxu0 %v1274
    %1855 = vmatprep.subr.bf16.mxu0 %v1283
    %1856 = vmatpush1.bf16.msra.mxu0 %v1282
    %1857 = vmatprep.subr.bf16.mxu0 %v1291
    %1858 = vmatpush1.bf16.msra.mxu0 %v1290
    %1859 = vmatprep.subr.bf16.mxu0 %v1299
    %1860 = vmatpush1.bf16.msra.mxu0 %v1298
    %1861 = vmatprep.subr.bf16.mxu0 %v1307
    %1862 = vmatpush1.bf16.msra.mxu0 %v1306
    %1863 = vmatprep.subr.bf16.mxu0 %v1315
    %1864 = vmatpush1.bf16.msra.mxu0 %v1314
    %1865 = vmatprep.subr.bf16.mxu0 %v1323
    %1866 = vmatpush1.bf16.msra.mxu0 %v1322
    %1867 = vmatprep.subr.bf16.mxu0 %v1331
    %1868 = vmatpush1.bf16.msra.mxu0 %v1330
    %1869 = vmatprep.subr.bf16.mxu0 %v1339
    %1870 = vmatpush1.bf16.msra.mxu0 %v1338
    %1871 = vmatprep.subr.bf16.mxu0 %v1347
    %1872 = vmatpush1.bf16.msra.mxu0 %v1346
    %1873 = vmatprep.subr.bf16.mxu0 %v1355
    %1874 = vmatpush1.bf16.msra.mxu0 %v1354
    %1875 = vmatprep.subr.bf16.mxu0 %v1363
    %1876 = vmatpush1.bf16.msra.mxu0 %v1362
    %1877 = vmatprep.subr.bf16.mxu0 %v1371
    %1878 = vmatpush1.bf16.msra.mxu0 %v1370
    %1879 = vmatprep.subr.bf16.mxu0 %v1379
    %1880 = vmatpush1.bf16.msra.mxu0 %v1378
    %1881 = vmatprep.subr.bf16.mxu0 %v1387
    %1882 = vmatpush1.bf16.msra.mxu0 %v1386
    %1883 = vmatprep.mubr.bf16.mxu0 %v361
    %1884 = vmatmul.mubr.bf16.gmra.mrb[0].mxu0 %v360
    %v1885 = vpop.f32.mrb[0].mxu0
    %v1886 = vadd.f32 %v1845, %v1885
    %v1887 = vpop.f32.mrb[0].mxu0
    %v1888 = vadd.f32 %v1847, %v1887
    %v1889 = vpop.f32.mrb[0].mxu0
    %v1890 = vpop.f32.mrb[0].mxu0
    %1891 = vdwg.mxu0
    %1892 = vmatprep.subr.bf16.mxu0 %v1141
    %1893 = vmatpush1.bf16.msra.mxu0 %v1140
    %1894 = vmatprep.subr.bf16.mxu0 %v1149
    %1895 = vmatpush1.bf16.msra.mxu0 %v1148
    %1896 = vmatprep.subr.bf16.mxu0 %v1157
    %1897 = vmatpush1.bf16.msra.mxu0 %v1156
    %1898 = vmatprep.subr.bf16.mxu0 %v1165
    %1899 = vmatpush1.bf16.msra.mxu0 %v1164
    %1900 = vmatprep.subr.bf16.mxu0 %v1173
    %1901 = vmatpush1.bf16.msra.mxu0 %v1172
    %1902 = vmatprep.subr.bf16.mxu0 %v1181
    %1903 = vmatpush1.bf16.msra.mxu0 %v1180
    %1904 = vmatprep.subr.bf16.mxu0 %v1189
    %1905 = vmatpush1.bf16.msra.mxu0 %v1188
    %1906 = vmatprep.subr.bf16.mxu0 %v1197
    %1907 = vmatpush1.bf16.msra.mxu0 %v1196
    %1908 = vmatprep.subr.bf16.mxu0 %v1205
    %1909 = vmatpush1.bf16.msra.mxu0 %v1204
    %1910 = vmatprep.subr.bf16.mxu0 %v1213
    %1911 = vmatpush1.bf16.msra.mxu0 %v1212
    %1912 = vmatprep.subr.bf16.mxu0 %v1221
    %1913 = vmatpush1.bf16.msra.mxu0 %v1220
    %1914 = vmatprep.subr.bf16.mxu0 %v1229
    %1915 = vmatpush1.bf16.msra.mxu0 %v1228
    %1916 = vmatprep.subr.bf16.mxu0 %v1237
    %1917 = vmatpush1.bf16.msra.mxu0 %v1236
    %1918 = vmatprep.subr.bf16.mxu0 %v1245
    %1919 = vmatpush1.bf16.msra.mxu0 %v1244
    %1920 = vmatprep.subr.bf16.mxu0 %v1253
    %1921 = vmatpush1.bf16.msra.mxu0 %v1252
    %1922 = vmatprep.subr.bf16.mxu0 %v1261
    %1923 = vmatpush1.bf16.msra.mxu0 %v1260
    %1924 = vmatprep.mubr.bf16.mxu0 %v359
    %1925 = vmatmul.mubr.bf16.gmra.mrb[0].mxu0 %v358
    %v1926 = vpop.f32.mrb[0].mxu0
    %v1927 = vadd.f32 %v339, %v1926
    %v1928 = vpop.f32.mrb[0].mxu0
    %v1929 = vadd.f32 %v343, %v1928
    %v1930 = vpop.f32.mrb[0].mxu0
    %v1931 = vpop.f32.mrb[0].mxu0
    %1932 = vdwg.mxu0
    %1933 = vmatprep.subr.bf16.mxu0 %v1269
    %1934 = vmatpush1.bf16.msra.mxu0 %v1268
    %1935 = vmatprep.subr.bf16.mxu0 %v1277
    %1936 = vmatpush1.bf16.msra.mxu0 %v1276
    %1937 = vmatprep.subr.bf16.mxu0 %v1285
    %1938 = vmatpush1.bf16.msra.mxu0 %v1284
    %1939 = vmatprep.subr.bf16.mxu0 %v1293
    %1940 = vmatpush1.bf16.msra.mxu0 %v1292
    %1941 = vmatprep.subr.bf16.mxu0 %v1301
    %1942 = vmatpush1.bf16.msra.mxu0 %v1300
    %1943 = vmatprep.subr.bf16.mxu0 %v1309
    %1944 = vmatpush1.bf16.msra.mxu0 %v1308
    %1945 = vmatprep.subr.bf16.mxu0 %v1317
    %1946 = vmatpush1.bf16.msra.mxu0 %v1316
    %1947 = vmatprep.subr.bf16.mxu0 %v1325
    %1948 = vmatpush1.bf16.msra.mxu0 %v1324
    %1949 = vmatprep.subr.bf16.mxu0 %v1333
    %1950 = vmatpush1.bf16.msra.mxu0 %v1332
    %1951 = vmatprep.subr.bf16.mxu0 %v1341
    %1952 = vmatpush1.bf16.msra.mxu0 %v1340
    %1953 = vmatprep.subr.bf16.mxu0 %v1349
    %1954 = vmatpush1.bf16.msra.mxu0 %v1348
    %1955 = vmatprep.subr.bf16.mxu0 %v1357
    %1956 = vmatpush1.bf16.msra.mxu0 %v1356
    %1957 = vmatprep.subr.bf16.mxu0 %v1365
    %1958 = vmatpush1.bf16.msra.mxu0 %v1364
    %1959 = vmatprep.subr.bf16.mxu0 %v1373
    %1960 = vmatpush1.bf16.msra.mxu0 %v1372
    %1961 = vmatprep.subr.bf16.mxu0 %v1381
    %1962 = vmatpush1.bf16.msra.mxu0 %v1380
    %1963 = vmatprep.subr.bf16.mxu0 %v1389
    %1964 = vmatpush1.bf16.msra.mxu0 %v1388
    %1965 = vmatprep.mubr.bf16.mxu0 %v361
    %1966 = vmatmul.mubr.bf16.gmra.mrb[0].mxu0 %v360
    %v1967 = vpop.f32.mrb[0].mxu0
    %v1968 = vadd.f32 %v1927, %v1967
    %v1969 = vpop.f32.mrb[0].mxu0
    %v1970 = vadd.f32 %v1929, %v1969
    %v1971 = vpop.f32.mrb[0].mxu0
    %v1972 = vpop.f32.mrb[0].mxu0
    %1973 = vdwg.mxu0
    %v1974 = vtanh.pop %v1722
    %v1975 = vtanh.pop %v1724
    %v1976 = vtanh.pop %v1804
    %v1977 = vtanh.pop %v1806
    %v1978 = vxor.u32 %v1886, 2147483648
    %v1979 = vxor.u32 %v1888, 2147483648
    %v1980 = vxor.u32 %v1968, 2147483648
    %v1981 = vxor.u32 %v1970, 2147483648
    %v1982 = vmul.f32 %v1978, 1.442695
    %v1983 = vpow.pop %v1982
    %v1984 = vmul.f32 %v1979, 1.442695
    %v1985 = vpow.pop %v1984
    %v1986 = vmul.f32 %v1980, 1.442695
    %v1987 = vpow.pop %v1986
    %v1988 = vmul.f32 %v1981, 1.442695
    %v1989 = vpow.pop %v1988
    %v1990 = vadd.f32 %v1983, 1.0
    %v1991 = vadd.f32 %v1985, 1.0
    %v1992 = vadd.f32 %v1987, 1.0
    %v1993 = vadd.f32 %v1989, 1.0
    %v1994 = vrcp.pop %v1990
    %v1995 = vmul.f32 1.0, %v1994
    %v1996 = vrcp.pop %v1991
    %v1997 = vmul.f32 1.0, %v1996
    %v1998 = vrcp.pop %v1992
    %v1999 = vmul.f32 1.0, %v1998
    %v2000 = vrcp.pop %v1993
    %v2001 = vmul.f32 1.0, %v2000
    %v2002 = vunpack.c.l.bf16 %v52
    %v2003 = vunpack.c.h.bf16 %v52
    %v2004 = vunpack.c.l.bf16 %v53
    %v2005 = vunpack.c.h.bf16 %v53
    %v2006 = vsub.f32 %v1974, %v2002
    %v2007 = vsub.f32 %v1975, %v2003
    %v2008 = vsub.f32 %v1976, %v2004
    %v2009 = vsub.f32 %v1977, %v2005
    %v2010 = vmul.f32 %v1995, %v2006
    %v2011 = vmul.f32 %v1997, %v2007
    %v2012 = vmul.f32 %v1999, %v2008
    %v2013 = vmul.f32 %v2001, %v2009
    %v2014 = vadd.f32 %v2002, %v2010
    %v2015 = vadd.f32 %v2003, %v2011
    %v2016 = vadd.f32 %v2004, %v2012
    %v2017 = vadd.f32 %v2005, %v2013
    %2018 = vst [vmem:[#allocation8] sm:$0xff] %v2014
    %2019 = vst [vmem:[#allocation8 + $0x8] sm:$0xff] %v2015
    %2020 = vst [vmem:[#allocation8 + $0x10] sm:$0xff] %v2016
    %2021 = vst [vmem:[#allocation8 + $0x18] sm:$0xff] %v2017
    // Predicated region
    $region26: #{tpu_custom_call.1} parent=1 // pred_check
      _
    $region27: #{tpu_custom_call.1} parent=1 // pred_check_branch
      %2023 = sbr.rel (0) target = $region29
    $region28: #{tpu_custom_call.1} parent=1 // pred_region
      %s2025 = ssub.s32 512, 512
      %2026 = vsyncadd [#allocation4], %s2025
      %s2028 = sshll.u32 [#allocation8], 4
      %s2029 = int_to_ptr.vmem [resolvable:$true] %s2028
      %2031 = dma.vmem_to_hbm [thread:$0]  %s2029, 512, %s3, [#allocation4]
    $region29: #{tpu_custom_call.1} parent=1 // pred_fallthru
      _
    // Predicated region
    $region30: #{tpu_custom_call.1} parent=1 // pred_check
      _
    $region31: #{tpu_custom_call.1} parent=1 // pred_check_branch
      %2033 = sbr.rel (0) target = $region33
    $region32: #{tpu_custom_call.1} parent=1 // pred_region
      %2034 = dma.done [#allocation4], 512
    $region33: #{tpu_custom_call.1} parent=1 // pred_fallthru
      _
    %2035 = vsyncpa [#allocation3], 1
    %2036 = vsyncpa [#allocation6], 1
    %2037 = vsyncpa [#allocation4], 1

</llo_original>
